<compile_context>
chip_gen: v6e
topology: v6e:2x2x1
jax: 0.10.0
libtpu: 0.0.40
codegen_flags: <defaults>
</compile_context>

<pallas_src>
import jax
import jax.numpy as jnp
from jax.experimental import pallas as pl
from jax.experimental.pallas import tpu as pltpu

EPS = 1e-5


def _round_up(x, m):
    return ((x + m - 1) // m) * m


def _pad_to(a, shape):
    return jnp.pad(a, [(0, t - s) for s, t in zip(a.shape, shape)])


def fgdn_kernel(
    x_ref, batch_ref,
    w1_ref, b1_ref,
    cw_ref, cb_ref,
    s3_ref, t3_ref,
    fc1_w, fc1_b, fc2_w, fc2_b, fc3_w, fc3_b,
    a3_ref,
    out_ref,
    pooled_acc,
):
    i = pl.program_id(0)

    @pl.when(i == 0)
    def _():
        pooled_acc[...] = jnp.zeros_like(pooled_acc)

    # ---- conv1 (bn1 already folded into w1/b1) + ReLU -------------------
    h = jnp.dot(x_ref[...], w1_ref[...],
                preferred_element_type=jnp.float32) + b1_ref[...]
    h = jnp.maximum(h, 0.0)

    # ---- hidden ChebConv(K=1) chain: pure matmul + bias + ReLU ----------
    # (bn3 after layer l was folded into layer l+1 host-side)
    for l in range(cw_ref.shape[0]):                 # static unroll
        h = jnp.dot(h, cw_ref[l],
                    preferred_element_type=jnp.float32) + cb_ref[l]
        h = jnp.maximum(h, 0.0)

    # ---- last bn3 affine (shift is node-count dependent through pooling,
    #      so it cannot be folded past the pool) -------------------------
    h = h * s3_ref[...] + t3_ref[...]

    # ---- per-tile global_add_pool via one-hot matmul on the MXU ---------
    # Padded nodes carry batch id -1 and match no graph row.
    G = pooled_acc.shape[0]
    tile_n = h.shape[0]
    g_iota = jax.lax.broadcasted_iota(jnp.int32, (G, tile_n), 0)
    onehot = (g_iota == batch_ref[...]).astype(jnp.float32)       # [G, TILE_N]
    pooled_acc[...] += jnp.dot(onehot, h,
                               preferred_element_type=jnp.float32)

    # ---- FC head, only on the final node tile ---------------------------
    @pl.when(i == pl.num_programs(0) - 1)
    def _():
        a3 = a3_ref[0, 0]
        z = jnp.dot(pooled_acc[...], fc1_w[...],
                    preferred_element_type=jnp.float32) + fc1_b[...]
        z = jnp.where(z >= 0.0, z, a3 * z)           # PReLU(a3)
        # dropout: identity in eval mode
        z = jax.nn.sigmoid(
            jnp.dot(z, fc2_w[...], preferred_element_type=jnp.float32)
            + fc2_b[...])
        out_ref[...] = (
            jnp.dot(z, fc3_w[...], preferred_element_type=jnp.float32)
            + fc3_b[...])


def fgdn_forward(x, batch, params, num_graphs, *, tile_n=128):
    """x: [N, Fin] f32, batch: [N] int32 graph ids in [0, num_graphs)."""
    N, Fin = x.shape
    D = params["w1"].shape[1]
    D2 = params["fc2_w"].shape[1]
    C = params["fc3_w"].shape[1]
    L1 = params["convs_w"].shape[0]                  # nb_layers - 1

    # ---- host-side BN folding (eval mode, one-time precompute) ----------
    scale1 = params["bn1_g"] * jax.lax.rsqrt(params["bn1_v"] + EPS)   # [1,Fin]
    shift1 = params["bn1_b"] - params["bn1_m"] * scale1
    w1_f = params["w1"] * scale1[0][:, None]                          # [Fin,D]
    b1_f = params["b1"] + shift1 @ params["w1"]                       # [1,D]

    scale3 = params["bn3_g"] * jax.lax.rsqrt(params["bn3_v"] + EPS)   # [1,D]
    shift3 = params["bn3_b"] - params["bn3_m"] * scale3
    cw, cb = params["convs_w"], params["convs_b"]
    cw_f, cb_f = [cw[0]], [cb[0]]
    for l in range(1, L1):
        cw_f.append(scale3[0][:, None] * cw[l])
        cb_f.append(shift3 @ cw[l] + cb[l])
    cw_f = jnp.stack(cw_f)
    cb_f = jnp.stack(cb_f)

    # ---- lane/sublane padding -------------------------------------------
    Fin_p = _round_up(Fin, 8)
    D_p = _round_up(D, 128)
    D2_p = _round_up(D2, 128)
    C_p = _round_up(C, 128)
    G_p = _round_up(max(num_graphs, 8), 8)
    N_p = _round_up(N, tile_n)

    x_p = _pad_to(x.astype(jnp.float32), (N_p, Fin_p))
    batch_p = jnp.pad(batch.astype(jnp.int32), (0, N_p - N),
                      constant_values=-1).reshape(1, N_p)

    inputs = (
        x_p, batch_p,
        _pad_to(w1_f, (Fin_p, D_p)), _pad_to(b1_f, (1, D_p)),
        _pad_to(cw_f, (L1, D_p, D_p)), _pad_to(cb_f, (L1, 1, D_p)),
        _pad_to(scale3, (1, D_p)), _pad_to(shift3, (1, D_p)),
        _pad_to(params["fc1_w"], (D_p, D_p)), _pad_to(params["fc1_b"], (1, D_p)),
        _pad_to(params["fc2_w"], (D_p, D2_p)), _pad_to(params["fc2_b"], (1, D2_p)),
        _pad_to(params["fc3_w"], (D2_p, C_p)), _pad_to(params["fc3_b"], (1, C_p)),
        params["a3"],
    )

    def const_spec(shape):
        nd = len(shape)
        return pl.BlockSpec(shape, lambda i, _nd=nd: (0,) * _nd)

    in_specs = [
        pl.BlockSpec((tile_n, Fin_p), lambda i: (i, 0)),    # x: tiled over nodes
        pl.BlockSpec((1, tile_n), lambda i: (0, i)),        # batch ids per tile
        const_spec((Fin_p, D_p)), const_spec((1, D_p)),
        const_spec((L1, D_p, D_p)), const_spec((L1, 1, D_p)),
        const_spec((1, D_p)), const_spec((1, D_p)),
        const_spec((D_p, D_p)), const_spec((1, D_p)),
        const_spec((D_p, D2_p)), const_spec((1, D2_p)),
        const_spec((D2_p, C_p)), const_spec((1, C_p)),
        pl.BlockSpec(memory_space=pltpu.MemorySpace.SMEM),  # a3 scalar
    ]

    flops = int(2 * N_p * (Fin_p * D_p + L1 * D_p * D_p + G_p * D_p)
                + 2 * G_p * (D_p * D_p + D_p * D2_p + D2_p * C_p))
    bytes_accessed = int(4 * (N_p * (Fin_p + 1)
                              + Fin_p * D_p + L1 * D_p * D_p + 4 * D_p
                              + D_p * D_p + D_p * D2_p + D2_p * C_p
                              + G_p * C_p))

    out = pl.pallas_call(
        fgdn_kernel,
        out_shape=jax.ShapeDtypeStruct((G_p, C_p), jnp.float32),
        grid=(N_p // tile_n,),
        in_specs=in_specs,
        out_specs=pl.BlockSpec((G_p, C_p), lambda i: (0, 0)),
        scratch_shapes=[pltpu.VMEM((G_p, D_p), jnp.float32)],
        compiler_params=pltpu.CompilerParams(
            dimension_semantics=("arbitrary",),     # node axis is a reduction
            vmem_limit_bytes=32 * 1024 * 1024),
        cost_estimate=pl.CostEstimate(
            flops=flops,
            transcendentals=int(G_p * D2_p),
            bytes_accessed=bytes_accessed),
    )(*inputs)

    return out[:num_graphs, :C]


def fgdn_reference(x, batch, params, num_graphs):
    """Pure-JAX reference of the same eval-mode forward (unfolded, unpadded)."""
    def bn(h, g, b, m, v):
        return (h - m) * (g * jax.lax.rsqrt(v + EPS)) + b

    h = bn(x, params["bn1_g"], params["bn1_b"], params["bn1_m"], params["bn1_v"])
    h = jnp.maximum(h @ params["w1"] + params["b1"], 0.0)
    for i in range(params["convs_w"].shape[0]):
        h = jnp.maximum(h @ params["convs_w"][i] + params["convs_b"][i], 0.0)
        h = bn(h, params["bn3_g"], params["bn3_b"], params["bn3_m"], params["bn3_v"])
    onehot = (jnp.arange(num_graphs)[:, None] == batch[None, :]).astype(jnp.float32)
    pooled = onehot @ h
    z = pooled @ params["fc1_w"] + params["fc1_b"]
    z = jnp.where(z >= 0.0, z, params["a3"] * z)
    z = jax.nn.sigmoid(z @ params["fc2_w"] + params["fc2_b"])
    return z @ params["fc3_w"] + params["fc3_b"]


def make_params(key, in_size, d_model, nb_class, nb_layers):
    D, D2 = d_model, d_model // 2
    ks = jax.random.split(key, 16)

    def w(k, shape, s=0.1):
        return jax.random.normal(k, shape, jnp.float32) * s

    return dict(
        bn1_g=1.0 + w(ks[0], (1, in_size)),
        bn1_b=w(ks[1], (1, in_size)),
        bn1_m=w(ks[2], (1, in_size)),
        bn1_v=1.0 + jnp.abs(w(ks[3], (1, in_size))),
        w1=w(ks[4], (in_size, D)),
        b1=w(ks[5], (1, D)),
        convs_w=w(ks[6], (nb_layers - 1, D, D)),
        convs_b=w(ks[7], (nb_layers - 1, 1, D)),
        bn3_g=1.0 + w(ks[8], (1, D)),
        bn3_b=w(ks[9], (1, D)),
        bn3_m=w(ks[10], (1, D)),
        bn3_v=1.0 + jnp.abs(w(ks[11], (1, D))),
        fc1_w=w(ks[12], (D, D)),
        fc1_b=w(ks[13], (1, D)),
        fc2_w=w(ks[14], (D, D2)),
        fc2_b=jnp.zeros((1, D2), jnp.float32),
        fc3_w=w(ks[15], (D2, nb_class)),
        fc3_b=jnp.zeros((1, nb_class), jnp.float32),
        a3=jnp.full((1, 1), 0.25, jnp.float32),
    )


if __name__ == "__main__":
    # Small synthetic graph batch: 300 nodes split into 2 graphs.
    in_size, d_model, nb_class, nb_layers = 4, 32, 3, 4
    N_nodes, num_graphs = 300, 2

    key = jax.random.PRNGKey(0)
    kx, kp = jax.random.split(key)
    x = jax.random.normal(kx, (N_nodes, in_size), jnp.float32)
    batch = jnp.where(jnp.arange(N_nodes) < N_nodes // 2, 0, 1).astype(jnp.int32)
    # TODO(synk): edge_index unused — ChebConv with K=1 reduces to a dense linear.

    params = make_params(kp, in_size, d_model, nb_class, nb_layers)

    out = fgdn_forward(x, batch, params, num_graphs)
    out = jax.block_until_ready(out)

    ref = fgdn_reference(x, batch, params, num_graphs)
    assert out.shape == (num_graphs, nb_class)
    assert jnp.allclose(out, ref, atol=1e-4, rtol=1e-4), (out, ref)
    print("KERNEL_OK")
</pallas_src>

<mosaic_0001>
module attributes {stable_mosaic.version = 11 : i64} {
  func.func @fgdn_kernel(%arg0: i32, %arg1: memref<128x8xf32, #tpu.memory_space<vmem>>, %arg2: memref<1x128xi32, #tpu.memory_space<vmem>>, %arg3: memref<8x128xf32, #tpu.memory_space<vmem>>, %arg4: memref<1x128xf32, #tpu.memory_space<vmem>>, %arg5: memref<3x128x128xf32, #tpu.memory_space<vmem>>, %arg6: memref<3x1x128xf32, #tpu.memory_space<vmem>>, %arg7: memref<1x128xf32, #tpu.memory_space<vmem>>, %arg8: memref<1x128xf32, #tpu.memory_space<vmem>>, %arg9: memref<128x128xf32, #tpu.memory_space<vmem>>, %arg10: memref<1x128xf32, #tpu.memory_space<vmem>>, %arg11: memref<128x128xf32, #tpu.memory_space<vmem>>, %arg12: memref<1x128xf32, #tpu.memory_space<vmem>>, %arg13: memref<128x128xf32, #tpu.memory_space<vmem>>, %arg14: memref<1x128xf32, #tpu.memory_space<vmem>>, %arg15: memref<1x1xf32, #tpu.memory_space<smem>>, %arg16: memref<8x128xf32, #tpu.memory_space<vmem>>, %arg17: memref<8x128xf32, #tpu.memory_space<vmem>>) attributes {dimension_semantics = [#tpu.dimension_semantics<arbitrary>], iteration_bounds = array<i64: 3>, scalar_prefetch = 0 : i64, scratch_operands = 1 : i64, tpu.core_type = #tpu.core_type<tc>, window_params = [{transform_indices = @transform_0, window_bounds = array<i64: 128, 8>}, {transform_indices = @transform_1, window_bounds = array<i64: 1, 128>}, {pipeline_mode = #tpu.pipeline_mode<synchronous>, transform_indices = @transform_2, window_bounds = array<i64: 8, 128>}, {pipeline_mode = #tpu.pipeline_mode<synchronous>, transform_indices = @transform_3, window_bounds = array<i64: 1, 128>}, {pipeline_mode = #tpu.pipeline_mode<synchronous>, transform_indices = @transform_4, window_bounds = array<i64: 3, 128, 128>}, {pipeline_mode = #tpu.pipeline_mode<synchronous>, transform_indices = @transform_5, window_bounds = array<i64: 3, 1, 128>}, {pipeline_mode = #tpu.pipeline_mode<synchronous>, transform_indices = @transform_6, window_bounds = array<i64: 1, 128>}, {pipeline_mode = #tpu.pipeline_mode<synchronous>, transform_indices = @transform_7, window_bounds = array<i64: 1, 128>}, {pipeline_mode = #tpu.pipeline_mode<synchronous>, transform_indices = @transform_8, window_bounds = array<i64: 128, 128>}, {pipeline_mode = #tpu.pipeline_mode<synchronous>, transform_indices = @transform_9, window_bounds = array<i64: 1, 128>}, {pipeline_mode = #tpu.pipeline_mode<synchronous>, transform_indices = @transform_10, window_bounds = array<i64: 128, 128>}, {pipeline_mode = #tpu.pipeline_mode<synchronous>, transform_indices = @transform_11, window_bounds = array<i64: 1, 128>}, {pipeline_mode = #tpu.pipeline_mode<synchronous>, transform_indices = @transform_12, window_bounds = array<i64: 128, 128>}, {pipeline_mode = #tpu.pipeline_mode<synchronous>, transform_indices = @transform_13, window_bounds = array<i64: 1, 128>}, {transform_indices = @transform_14, window_bounds = array<i64: 1, 1>}, {pipeline_mode = #tpu.pipeline_mode<synchronous>, transform_indices = @transform_15, window_bounds = array<i64: 8, 128>}]} {
    %c0_i32 = arith.constant 0 : i32
    %0 = arith.cmpi eq, %arg0, %c0_i32 : i32
    %1 = arith.extui %0 : i1 to i32
    %c0_i32_0 = arith.constant 0 : i32
    %2 = arith.cmpi ne, %1, %c0_i32_0 : i32
    scf.if %2 {
      %cst_41 = arith.constant 0.000000e+00 : f32
      %57 = vector.broadcast %cst_41 : f32 to vector<8x128xf32>
      %c0_42 = arith.constant 0 : index
      %c0_43 = arith.constant 0 : index
      %58 = vector.load %arg17[%c0_42, %c0_43] : memref<8x128xf32, #tpu.memory_space<vmem>>, vector<8x128xf32>
      tpu.vector_store %arg17[%c0_42, %c0_43], %57 {strides = array<i32>} : memref<8x128xf32, #tpu.memory_space<vmem>>, vector<8x128xf32>,
    } else {
    }
    %c0 = arith.constant 0 : index
    %c0_1 = arith.constant 0 : index
    %3 = vector.load %arg1[%c0, %c0_1] : memref<128x8xf32, #tpu.memory_space<vmem>>, vector<128x8xf32>
    %c0_2 = arith.constant 0 : index
    %c0_3 = arith.constant 0 : index
    %4 = vector.load %arg3[%c0_2, %c0_3] : memref<8x128xf32, #tpu.memory_space<vmem>>, vector<8x128xf32>
    %cst = arith.constant dense<0.000000e+00> : vector<128x128xf32>
    %5 = tpu.matmul %3, %4, %cst {dimension_numbers = #tpu.dot_dimension_numbers<[1], [0], [0], [1], [0, 0, 1, 1], [], []>} : vector<128x8xf32>, vector<8x128xf32>, vector<128x128xf32> -> vector<128x128xf32>
    %c0_4 = arith.constant 0 : index
    %c0_5 = arith.constant 0 : index
    %6 = vector.load %arg4[%c0_4, %c0_5] : memref<1x128xf32, #tpu.memory_space<vmem>>, vector<1x128xf32>
    %7 = vector.broadcast %6 : vector<1x128xf32> to vector<128x128xf32>
    %8 = arith.addf %5, %7 : vector<128x128xf32>
    %cst_6 = arith.constant 0.000000e+00 : f32
    %9 = vector.broadcast %cst_6 : f32 to vector<128x128xf32>
    %10 = arith.maximumf %8, %9 : vector<128x128xf32>
    %c0_7 = arith.constant 0 : index
    %c0_8 = arith.constant 0 : index
    %c0_9 = arith.constant 0 : index
    %11 = vector.load %arg5[%c0_7, %c0_8, %c0_9] : memref<3x128x128xf32, #tpu.memory_space<vmem>>, vector<1x128x128xf32>
    %12 = vector.shape_cast %11 : vector<1x128x128xf32> to vector<128x128xf32>
    %cst_10 = arith.constant dense<0.000000e+00> : vector<128x128xf32>
    %13 = tpu.matmul %10, %12, %cst_10 {dimension_numbers = #tpu.dot_dimension_numbers<[1], [0], [0], [1], [0, 0, 1, 1], [], []>} : vector<128x128xf32>, vector<128x128xf32>, vector<128x128xf32> -> vector<128x128xf32>
    %c0_11 = arith.constant 0 : index
    %c0_12 = arith.constant 0 : index
    %c0_13 = arith.constant 0 : index
    %14 = vector.load %arg6[%c0_11, %c0_12, %c0_13] : memref<3x1x128xf32, #tpu.memory_space<vmem>>, vector<1x1x128xf32>
    %15 = vector.shape_cast %14 : vector<1x1x128xf32> to vector<1x128xf32>
    %16 = vector.broadcast %15 : vector<1x128xf32> to vector<128x128xf32>
    %17 = arith.addf %13, %16 : vector<128x128xf32>
    %cst_14 = arith.constant 0.000000e+00 : f32
    %18 = vector.broadcast %cst_14 : f32 to vector<128x128xf32>
    %19 = arith.maximumf %17, %18 : vector<128x128xf32>
    %c1 = arith.constant 1 : index
    %c0_15 = arith.constant 0 : index
    %c0_16 = arith.constant 0 : index
    %20 = vector.load %arg5[%c1, %c0_15, %c0_16] : memref<3x128x128xf32, #tpu.memory_space<vmem>>, vector<1x128x128xf32>
    %21 = vector.shape_cast %20 : vector<1x128x128xf32> to vector<128x128xf32>
    %cst_17 = arith.constant dense<0.000000e+00> : vector<128x128xf32>
    %22 = tpu.matmul %19, %21, %cst_17 {dimension_numbers = #tpu.dot_dimension_numbers<[1], [0], [0], [1], [0, 0, 1, 1], [], []>} : vector<128x128xf32>, vector<128x128xf32>, vector<128x128xf32> -> vector<128x128xf32>
    %c1_18 = arith.constant 1 : index
    %c0_19 = arith.constant 0 : index
    %c0_20 = arith.constant 0 : index
    %23 = vector.load %arg6[%c1_18, %c0_19, %c0_20] : memref<3x1x128xf32, #tpu.memory_space<vmem>>, vector<1x1x128xf32>
    %24 = vector.shape_cast %23 : vector<1x1x128xf32> to vector<1x128xf32>
    %25 = vector.broadcast %24 : vector<1x128xf32> to vector<128x128xf32>
    %26 = arith.addf %22, %25 : vector<128x128xf32>
    %cst_21 = arith.constant 0.000000e+00 : f32
    %27 = vector.broadcast %cst_21 : f32 to vector<128x128xf32>
    %28 = arith.maximumf %26, %27 : vector<128x128xf32>
    %c2 = arith.constant 2 : index
    %c0_22 = arith.constant 0 : index
    %c0_23 = arith.constant 0 : index
    %29 = vector.load %arg5[%c2, %c0_22, %c0_23] : memref<3x128x128xf32, #tpu.memory_space<vmem>>, vector<1x128x128xf32>
    %30 = vector.shape_cast %29 : vector<1x128x128xf32> to vector<128x128xf32>
    %cst_24 = arith.constant dense<0.000000e+00> : vector<128x128xf32>
    %31 = tpu.matmul %28, %30, %cst_24 {dimension_numbers = #tpu.dot_dimension_numbers<[1], [0], [0], [1], [0, 0, 1, 1], [], []>} : vector<128x128xf32>, vector<128x128xf32>, vector<128x128xf32> -> vector<128x128xf32>
    %c2_25 = arith.constant 2 : index
    %c0_26 = arith.constant 0 : index
    %c0_27 = arith.constant 0 : index
    %32 = vector.load %arg6[%c2_25, %c0_26, %c0_27] : memref<3x1x128xf32, #tpu.memory_space<vmem>>, vector<1x1x128xf32>
    %33 = vector.shape_cast %32 : vector<1x1x128xf32> to vector<1x128xf32>
    %34 = vector.broadcast %33 : vector<1x128xf32> to vector<128x128xf32>
    %35 = arith.addf %31, %34 : vector<128x128xf32>
    %cst_28 = arith.constant 0.000000e+00 : f32
    %36 = vector.broadcast %cst_28 : f32 to vector<128x128xf32>
    %37 = arith.maximumf %35, %36 : vector<128x128xf32>
    %c0_29 = arith.constant 0 : index
    %c0_30 = arith.constant 0 : index
    %38 = vector.load %arg7[%c0_29, %c0_30] : memref<1x128xf32, #tpu.memory_space<vmem>>, vector<1x128xf32>
    %39 = vector.broadcast %38 : vector<1x128xf32> to vector<128x128xf32>
    %40 = arith.mulf %37, %39 : vector<128x128xf32>
    %c0_31 = arith.constant 0 : index
    %c0_32 = arith.constant 0 : index
    %41 = vector.load %arg8[%c0_31, %c0_32] : memref<1x128xf32, #tpu.memory_space<vmem>>, vector<1x128xf32>
    %42 = vector.broadcast %41 : vector<1x128xf32> to vector<128x128xf32>
    %43 = arith.addf %40, %42 : vector<128x128xf32>
    %44 = tpu.iota {dimensions = array<i32: 0>} : vector<8x128xi32>
    %c0_33 = arith.constant 0 : index
    %c0_34 = arith.constant 0 : index
    %45 = vector.load %arg2[%c0_33, %c0_34] : memref<1x128xi32, #tpu.memory_space<vmem>>, vector<1x128xi32>
    %46 = vector.broadcast %45 : vector<1x128xi32> to vector<8x128xi32>
    %47 = arith.cmpi eq, %44, %46 : vector<8x128xi32>
    %48 = arith.extui %47 : vector<8x128xi1> to vector<8x128xi32>
    %49 = arith.sitofp %48 : vector<8x128xi32> to vector<8x128xf32>
    %c0_35 = arith.constant 0 : index
    %c0_36 = arith.constant 0 : index
    %50 = vector.load %arg17[%c0_35, %c0_36] : memref<8x128xf32, #tpu.memory_space<vmem>>, vector<8x128xf32>
    %cst_37 = arith.constant dense<0.000000e+00> : vector<8x128xf32>
    %51 = tpu.matmul %49, %43, %cst_37 {dimension_numbers = #tpu.dot_dimension_numbers<[1], [0], [0], [1], [0, 0, 1, 1], [], []>} : vector<8x128xf32>, vector<128x128xf32>, vector<8x128xf32> -> vector<8x128xf32>
    %52 = arith.addf %50, %51 : vector<8x128xf32>
    %c0_38 = arith.constant 0 : index
    %c0_39 = arith.constant 0 : index
    %53 = vector.load %arg17[%c0_38, %c0_39] : memref<8x128xf32, #tpu.memory_space<vmem>>, vector<8x128xf32>
    tpu.vector_store %arg17[%c0_38, %c0_39], %52 {strides = array<i32>} : memref<8x128xf32, #tpu.memory_space<vmem>>, vector<8x128xf32>,
    %c2_i32 = arith.constant 2 : i32
    %54 = arith.cmpi eq, %arg0, %c2_i32 : i32
    %55 = arith.extui %54 : i1 to i32
    %c0_i32_40 = arith.constant 0 : i32
    %56 = arith.cmpi ne, %55, %c0_i32_40 : i32
    scf.if %56 {
      %c0_41 = arith.constant 0 : index
      %c0_42 = arith.constant 0 : index
      %57 = memref.load %arg15[%c0_41, %c0_42] : memref<1x1xf32, #tpu.memory_space<smem>>
      %c0_43 = arith.constant 0 : index
      %c0_44 = arith.constant 0 : index
      %58 = vector.load %arg17[%c0_43, %c0_44] : memref<8x128xf32, #tpu.memory_space<vmem>>, vector<8x128xf32>
      %c0_45 = arith.constant 0 : index
      %c0_46 = arith.constant 0 : index
      %59 = vector.load %arg9[%c0_45, %c0_46] : memref<128x128xf32, #tpu.memory_space<vmem>>, vector<128x128xf32>
      %cst_47 = arith.constant dense<0.000000e+00> : vector<8x128xf32>
      %60 = tpu.matmul %58, %59, %cst_47 {dimension_numbers = #tpu.dot_dimension_numbers<[1], [0], [0], [1], [0, 0, 1, 1], [], []>} : vector<8x128xf32>, vector<128x128xf32>, vector<8x128xf32> -> vector<8x128xf32>
      %c0_48 = arith.constant 0 : index
      %c0_49 = arith.constant 0 : index
      %61 = vector.load %arg10[%c0_48, %c0_49] : memref<1x128xf32, #tpu.memory_space<vmem>>, vector<1x128xf32>
      %62 = vector.broadcast %61 : vector<1x128xf32> to vector<8x128xf32>
      %63 = arith.addf %60, %62 : vector<8x128xf32>
      %cst_50 = arith.constant 0.000000e+00 : f32
      %64 = vector.broadcast %cst_50 : f32 to vector<8x128xf32>
      %65 = arith.cmpf oge, %63, %64 : vector<8x128xf32>
      %66 = vector.broadcast %57 : f32 to vector<8x128xf32>
      %67 = arith.mulf %66, %63 : vector<8x128xf32>
      %68 = arith.select %65, %63, %67 : vector<8x128xi1>, vector<8x128xf32>
      %c0_51 = arith.constant 0 : index
      %c0_52 = arith.constant 0 : index
      %69 = vector.load %arg11[%c0_51, %c0_52] : memref<128x128xf32, #tpu.memory_space<vmem>>, vector<128x128xf32>
      %cst_53 = arith.constant dense<0.000000e+00> : vector<8x128xf32>
      %70 = tpu.matmul %68, %69, %cst_53 {dimension_numbers = #tpu.dot_dimension_numbers<[1], [0], [0], [1], [0, 0, 1, 1], [], []>} : vector<8x128xf32>, vector<128x128xf32>, vector<8x128xf32> -> vector<8x128xf32>
      %c0_54 = arith.constant 0 : index
      %c0_55 = arith.constant 0 : index
      %71 = vector.load %arg12[%c0_54, %c0_55] : memref<1x128xf32, #tpu.memory_space<vmem>>, vector<1x128xf32>
      %72 = vector.broadcast %71 : vector<1x128xf32> to vector<8x128xf32>
      %73 = arith.addf %70, %72 : vector<8x128xf32>
      %74 = arith.negf %73 : vector<8x128xf32>
      %75 = math.exp %74 : vector<8x128xf32>
      %cst_56 = arith.constant 1.000000e+00 : f32
      %76 = vector.broadcast %cst_56 : f32 to vector<8x128xf32>
      %77 = arith.addf %76, %75 : vector<8x128xf32>
      %78 = arith.divf %76, %77 : vector<8x128xf32>
      %c0_57 = arith.constant 0 : index
      %c0_58 = arith.constant 0 : index
      %79 = vector.load %arg13[%c0_57, %c0_58] : memref<128x128xf32, #tpu.memory_space<vmem>>, vector<128x128xf32>
      %cst_59 = arith.constant dense<0.000000e+00> : vector<8x128xf32>
      %80 = tpu.matmul %78, %79, %cst_59 {dimension_numbers = #tpu.dot_dimension_numbers<[1], [0], [0], [1], [0, 0, 1, 1], [], []>} : vector<8x128xf32>, vector<128x128xf32>, vector<8x128xf32> -> vector<8x128xf32>
      %c0_60 = arith.constant 0 : index
      %c0_61 = arith.constant 0 : index
      %81 = vector.load %arg14[%c0_60, %c0_61] : memref<1x128xf32, #tpu.memory_space<vmem>>, vector<1x128xf32>
      %82 = vector.broadcast %81 : vector<1x128xf32> to vector<8x128xf32>
      %83 = arith.addf %80, %82 : vector<8x128xf32>
      %c0_62 = arith.constant 0 : index
      %c0_63 = arith.constant 0 : index
      %84 = vector.load %arg16[%c0_62, %c0_63] : memref<8x128xf32, #tpu.memory_space<vmem>>, vector<8x128xf32>
      tpu.vector_store %arg16[%c0_62, %c0_63], %83 {strides = array<i32>} : memref<8x128xf32, #tpu.memory_space<vmem>>, vector<8x128xf32>,
    } else {
    }
    return
  }
  func.func @transform_0(%arg0: i32) -> (i32, i32) {
    %c0_i32 = arith.constant 0 : i32
    %c0_i32_0 = arith.constant 0 : i32
    return %arg0, %c0_i32 : i32, i32
  }
  func.func @transform_1(%arg0: i32) -> (i32, i32) {
    %c0_i32 = arith.constant 0 : i32
    %c0_i32_0 = arith.constant 0 : i32
    return %c0_i32, %arg0 : i32, i32
  }
  func.func @transform_2(%arg0: i32) -> (i32, i32) {
    %c0_i32 = arith.constant 0 : i32
    %c0_i32_0 = arith.constant 0 : i32
    %c0_i32_1 = arith.constant 0 : i32
    return %c0_i32, %c0_i32_0 : i32, i32
  }
  func.func @transform_3(%arg0: i32) -> (i32, i32) {
    %c0_i32 = arith.constant 0 : i32
    %c0_i32_0 = arith.constant 0 : i32
    %c0_i32_1 = arith.constant 0 : i32
    return %c0_i32, %c0_i32_0 : i32, i32
  }
  func.func @transform_4(%arg0: i32) -> (i32, i32, i32) {
    %c0_i32 = arith.constant 0 : i32
    %c0_i32_0 = arith.constant 0 : i32
    %c0_i32_1 = arith.constant 0 : i32
    %c0_i32_2 = arith.constant 0 : i32
    return %c0_i32, %c0_i32_0, %c0_i32_1 : i32, i32, i32
  }
  func.func @transform_5(%arg0: i32) -> (i32, i32, i32) {
    %c0_i32 = arith.constant 0 : i32
    %c0_i32_0 = arith.constant 0 : i32
    %c0_i32_1 = arith.constant 0 : i32
    %c0_i32_2 = arith.constant 0 : i32
    return %c0_i32, %c0_i32_0, %c0_i32_1 : i32, i32, i32
  }
  func.func @transform_6(%arg0: i32) -> (i32, i32) {
    %c0_i32 = arith.constant 0 : i32
    %c0_i32_0 = arith.constant 0 : i32
    %c0_i32_1 = arith.constant 0 : i32
    return %c0_i32, %c0_i32_0 : i32, i32
  }
  func.func @transform_7(%arg0: i32) -> (i32, i32) {
    %c0_i32 = arith.constant 0 : i32
    %c0_i32_0 = arith.constant 0 : i32
    %c0_i32_1 = arith.constant 0 : i32
    return %c0_i32, %c0_i32_0 : i32, i32
  }
  func.func @transform_8(%arg0: i32) -> (i32, i32) {
    %c0_i32 = arith.constant 0 : i32
    %c0_i32_0 = arith.constant 0 : i32
    %c0_i32_1 = arith.constant 0 : i32
    return %c0_i32, %c0_i32_0 : i32, i32
  }
  func.func @transform_9(%arg0: i32) -> (i32, i32) {
    %c0_i32 = arith.constant 0 : i32
    %c0_i32_0 = arith.constant 0 : i32
    %c0_i32_1 = arith.constant 0 : i32
    return %c0_i32, %c0_i32_0 : i32, i32
  }
  func.func @transform_10(%arg0: i32) -> (i32, i32) {
    %c0_i32 = arith.constant 0 : i32
    %c0_i32_0 = arith.constant 0 : i32
    %c0_i32_1 = arith.constant 0 : i32
    return %c0_i32, %c0_i32_0 : i32, i32
  }
  func.func @transform_11(%arg0: i32) -> (i32, i32) {
    %c0_i32 = arith.constant 0 : i32
    %c0_i32_0 = arith.constant 0 : i32
    %c0_i32_1 = arith.constant 0 : i32
    return %c0_i32, %c0_i32_0 : i32, i32
  }
  func.func @transform_12(%arg0: i32) -> (i32, i32) {
    %c0_i32 = arith.constant 0 : i32
    %c0_i32_0 = arith.constant 0 : i32
    %c0_i32_1 = arith.constant 0 : i32
    return %c0_i32, %c0_i32_0 : i32, i32
  }
  func.func @transform_13(%arg0: i32) -> (i32, i32) {
    %c0_i32 = arith.constant 0 : i32
    %c0_i32_0 = arith.constant 0 : i32
    %c0_i32_1 = arith.constant 0 : i32
    return %c0_i32, %c0_i32_0 : i32, i32
  }
  func.func @transform_14(%arg0: i32) -> (i32, i32) {
    %c0_i32 = arith.constant 0 : i32
    %c0_i32_0 = arith.constant 0 : i32
    %c0_i32_1 = arith.constant 0 : i32
    return %c0_i32, %c0_i32_0 : i32, i32
  }
  func.func @transform_15(%arg0: i32) -> (i32, i32) {
    %c0_i32 = arith.constant 0 : i32
    %c0_i32_0 = arith.constant 0 : i32
    %c0_i32_1 = arith.constant 0 : i32
    return %c0_i32, %c0_i32_0 : i32, i32
  }
}

</mosaic_0001>

<llo_original>
// kernel: tpu_custom_call.1
$region0: #{tpu_custom_call.1}
  #allocation0 [shape = 'u32[]', space=smem, size = 0x4, offset = 0x4, fixed_abs, tag = 'smem constant byte address 0x4 - core index']
  #allocation1 [shape = 'u32[144,128]{1,0:T(1,128)}', space=vmem, size = 0x12000, scoped, tag = 'internal scratch']
  #allocation2 [shape = 'f32[8,128]{1,0:T(8,128)}', space=vmem, size = 0x1000, scoped, tag = 'scratch operand']
  #allocation3 [shape = 'f32[1,1]{1,0:T(1,128)S(6)}', space=smem, size = 0x200, scoped, tag = 'scoped memory for tpu_custom_call.1']
  %s0 = inlined_call_operand.vmem [shape: f32[384,8], index: 0, kind: input, shape index: {}]
  %s1 = inlined_call_operand.vmem [shape: s32[1,384], index: 1, kind: input, shape index: {}]
  %s2 = inlined_call_operand.vmem [shape: f32[8,128], index: 2, kind: input, shape index: {}]
  %s3 = inlined_call_operand.vmem [shape: f32[1,128], index: 3, kind: input, shape index: {}]
  %s4 = inlined_call_operand.vmem [shape: f32[3,128,128], index: 4, kind: input, shape index: {}]
  %s5 = inlined_call_operand.vmem [shape: f32[3,1,128], index: 5, kind: input, shape index: {}]
  %s6 = inlined_call_operand.vmem [shape: f32[1,128], index: 6, kind: input, shape index: {}]
  %s7 = inlined_call_operand.vmem [shape: f32[1,128], index: 7, kind: input, shape index: {}]
  %s8 = inlined_call_operand.hbm [shape: f32[128,128], index: 8, kind: input, shape index: {}]
  %s9 = inlined_call_operand.vmem [shape: f32[1,128], index: 9, kind: input, shape index: {}]
  %s10 = inlined_call_operand.hbm [shape: f32[128,128], index: 10, kind: input, shape index: {}]
  %s11 = inlined_call_operand.vmem [shape: f32[1,128], index: 11, kind: input, shape index: {}]
  %s12 = inlined_call_operand.hbm [shape: f32[128,128], index: 12, kind: input, shape index: {}]
  %s13 = inlined_call_operand.vmem [shape: f32[1,128], index: 13, kind: input, shape index: {}]
  %s14 = inlined_call_operand.<no memory space> [shape: f32[1,1], index: 14, kind: input, shape index: {}]
  %s15 = inlined_call_operand.hbm [shape: f32[8,128], index: 15, kind: output, shape index: {}]
  %s16 = sld [smem:[#allocation0]]
  $region113: #{tpu_custom_call.1} parent=0
    _
  %s18 = ssub.s32 1, %s16
  %s19 = scalar_select 0, %s18, %s16
  %20 = sst [smem:[#allocation3]] %s14
  $region1: #{tpu_custom_call.1} parent=0
    #allocation4 [shape = 'u8[65536]{0}', space=vmem, size = 0x10000, scoped, tag = 'input window, operand 8, single buffered']
    #allocation5 [shape = 's32[2]{0}', space=sflag, size = 0x8, scoped, tag = 'scoped memory for tpu_custom_call.1']
    #allocation6 [shape = 's32[2]{0}', space=sflag, size = 0x8, scoped, tag = 'scoped memory for tpu_custom_call.1']
    #allocation7 [shape = 'u8[65536]{0}', space=vmem, size = 0x10000, scoped, tag = 'input window, operand 10, single buffered']
    #allocation8 [shape = 's32[1]{0}', space=sflag, size = 0x4, scoped, tag = 'scoped memory for tpu_custom_call.1']
    #allocation9 [shape = 'u8[65536]{0}', space=vmem, size = 0x10000, scoped, tag = 'input window, operand 12, single buffered']
    #allocation10 [shape = 'u8[4096]{0}', space=vmem, size = 0x1000, scoped, tag = 'output window, operand 0, single buffered']
    %21 = vsyncpa [#allocation5], 0
    %22 = vsyncpa [#allocation8], 0
    %23 = vsyncpa [#allocation6], 0
    loop: start=0, step=1, limit=5
    $region2: #{tpu_custom_call.1} parent=1 // loop_pre_header
      _
    $region3: #{tpu_custom_call.1} parent=1 // loop_header
      %s25 = sphi 0, %s29
      %p26 = scmp.ge.s32.totalorder %s25, 5
      %s35 = sphi 0, %s37
      %s38 = sphi 0, %s35
      %s39 = sphi 0, %s38
      %s55 = sphi 0, %s39
      %s61 = sphi 0, %s63
      %s64 = sphi 0, %s61
      %s65 = sphi 0, %s64
      %s81 = sphi 0, %s65
      %s85 = sphi 0, %s85
      %s87 = sphi 0, %s85
      %s88 = sphi 0, %s87
      %s102 = sphi 0, %s88
      %s106 = sphi 0, %s106
      %s108 = sphi 0, %s106
      %s109 = sphi 0, %s108
      %s123 = sphi 0, %s109
      %s127 = sphi 0, %s127
      %s129 = sphi 0, %s127
      %s130 = sphi 0, %s129
      %s144 = sphi 0, %s130
      %s148 = sphi 0, %s148
      %s150 = sphi 0, %s148
      %s151 = sphi 0, %s150
      %s165 = sphi 0, %s151
      %s169 = sphi 0, %s169
      %s171 = sphi 0, %s169
      %s172 = sphi 0, %s171
      %s186 = sphi 0, %s172
      %s190 = sphi 0, %s190
      %s192 = sphi 0, %s190
      %s193 = sphi 0, %s192
      %s207 = sphi 0, %s193
      %s211 = sphi 0, %s211
      %s213 = sphi 0, %s211
      %s214 = sphi 0, %s213
      %s228 = sphi 0, %s214
      %s232 = sphi 0, %s232
      %s234 = sphi 0, %s232
      %s235 = sphi 0, %s234
      %s249 = sphi 0, %s235
      %s253 = sphi 0, %s253
      %s255 = sphi 0, %s253
      %s256 = sphi 0, %s255
      %s270 = sphi 0, %s256
      %s274 = sphi 0, %s274
      %s276 = sphi 0, %s274
      %s277 = sphi 0, %s276
      %s291 = sphi 0, %s277
      %s295 = sphi 0, %s295
      %s297 = sphi 0, %s295
      %s298 = sphi 0, %s297
      %s312 = sphi 0, %s298
      %s316 = sphi 0, %s316
      %s318 = sphi 0, %s316
      %s319 = sphi 0, %s318
      %s333 = sphi 0, %s319
      %s337 = sphi 0, %s337
      %s339 = sphi 0, %s337
      %s340 = sphi 0, %s339
      %s354 = sphi 0, %s340
      %s358 = sphi 0, %s358
      %s360 = sphi 0, %s358
      %s361 = sphi 0, %s360
      %s375 = sphi 0, %s361
    $region4: #{tpu_custom_call.1} parent=1 // loop_header_branch
      %28 = sbr.rel (%p26) target = $region8
    $region5: #{tpu_custom_call.1} parent=1 // loop_body
      %s30 = ssub.s32 %s25, 1
      %s31 = ssub.s32 %s25, 2
      %s32 = sadd.s32 %s25, 1
      %s33 = ssub.s32 %s25, %s32
      %p34 = scmp.eq.s32.totalorder %s33, 0
      %s36 = sadd.s32 %s35, 1
      %s37 = scalar_select %p34, %s35, %s36
      %p40 = pneg %p34
      %p41 = scmp.eq.s32.totalorder %s25, 2
      %p42 = por %p40, %p41
      %p43 = scmp.ne.s32.totalorder %s35, %s38
      %p44 = scmp.eq.s32.totalorder %s25, 0
      %p45 = por %p43, %p44
      %p46 = scmp.ne.s32.totalorder %s35, %s38
      %p47 = scmp.eq.s32.totalorder %s30, 2
      %p48 = por %p46, %p47
      %p49 = scmp.ne.s32.totalorder %s38, %s39
      %p50 = scmp.eq.s32.totalorder %s30, 0
      %p51 = por %p49, %p50
      %p52 = scmp.ne.s32.totalorder %s38, %s39
      %p53 = scmp.eq.s32.totalorder %s31, 2
      %p54 = por %p52, %p53
      %p56 = scmp.ne.s32.totalorder %s39, %s55
      %p57 = scmp.eq.s32.totalorder %s31, 0
      %p58 = por %p56, %p57
      %s59 = ssub.s32 %s25, %s32
      %p60 = scmp.eq.s32.totalorder %s59, 0
      %s62 = sadd.s32 %s61, 1
      %s63 = scalar_select %p60, %s61, %s62
      %p66 = pneg %p60
      %p67 = scmp.eq.s32.totalorder %s25, 2
      %p68 = por %p66, %p67
      %p69 = scmp.ne.s32.totalorder %s61, %s64
      %p70 = scmp.eq.s32.totalorder %s25, 0
      %p71 = por %p69, %p70
      %p72 = scmp.ne.s32.totalorder %s61, %s64
      %p73 = scmp.eq.s32.totalorder %s30, 2
      %p74 = por %p72, %p73
      %p75 = scmp.ne.s32.totalorder %s64, %s65
      %p76 = scmp.eq.s32.totalorder %s30, 0
      %p77 = por %p75, %p76
      %p78 = scmp.ne.s32.totalorder %s64, %s65
      %p79 = scmp.eq.s32.totalorder %s31, 2
      %p80 = por %p78, %p79
      %p82 = scmp.ne.s32.totalorder %s65, %s81
      %p83 = scmp.eq.s32.totalorder %s31, 0
      %p84 = por %p82, %p83
      %s86 = sadd.s32 %s85, 1
      %p89 = scmp.eq.s32.totalorder %s25, 2
      %p90 = scmp.ne.s32.totalorder %s85, %s87
      %p91 = scmp.eq.s32.totalorder %s25, 0
      %p92 = por %p90, %p91
      %p93 = scmp.ne.s32.totalorder %s85, %s87
      %p94 = scmp.eq.s32.totalorder %s30, 2
      %p95 = por %p93, %p94
      %p96 = scmp.ne.s32.totalorder %s87, %s88
      %p97 = scmp.eq.s32.totalorder %s30, 0
      %p98 = por %p96, %p97
      %p99 = scmp.ne.s32.totalorder %s87, %s88
      %p100 = scmp.eq.s32.totalorder %s31, 2
      %p101 = por %p99, %p100
      %p103 = scmp.ne.s32.totalorder %s88, %s102
      %p104 = scmp.eq.s32.totalorder %s31, 0
      %p105 = por %p103, %p104
      %s107 = sadd.s32 %s106, 1
      %p110 = scmp.eq.s32.totalorder %s25, 2
      %p111 = scmp.ne.s32.totalorder %s106, %s108
      %p112 = scmp.eq.s32.totalorder %s25, 0
      %p113 = por %p111, %p112
      %p114 = scmp.ne.s32.totalorder %s106, %s108
      %p115 = scmp.eq.s32.totalorder %s30, 2
      %p116 = por %p114, %p115
      %p117 = scmp.ne.s32.totalorder %s108, %s109
      %p118 = scmp.eq.s32.totalorder %s30, 0
      %p119 = por %p117, %p118
      %p120 = scmp.ne.s32.totalorder %s108, %s109
      %p121 = scmp.eq.s32.totalorder %s31, 2
      %p122 = por %p120, %p121
      %p124 = scmp.ne.s32.totalorder %s109, %s123
      %p125 = scmp.eq.s32.totalorder %s31, 0
      %p126 = por %p124, %p125
      %s128 = sadd.s32 %s127, 1
      %p131 = scmp.eq.s32.totalorder %s25, 2
      %p132 = scmp.ne.s32.totalorder %s127, %s129
      %p133 = scmp.eq.s32.totalorder %s25, 0
      %p134 = por %p132, %p133
      %p135 = scmp.ne.s32.totalorder %s127, %s129
      %p136 = scmp.eq.s32.totalorder %s30, 2
      %p137 = por %p135, %p136
      %p138 = scmp.ne.s32.totalorder %s129, %s130
      %p139 = scmp.eq.s32.totalorder %s30, 0
      %p140 = por %p138, %p139
      %p141 = scmp.ne.s32.totalorder %s129, %s130
      %p142 = scmp.eq.s32.totalorder %s31, 2
      %p143 = por %p141, %p142
      %p145 = scmp.ne.s32.totalorder %s130, %s144
      %p146 = scmp.eq.s32.totalorder %s31, 0
      %p147 = por %p145, %p146
      %s149 = sadd.s32 %s148, 1
      %p152 = scmp.eq.s32.totalorder %s25, 2
      %p153 = scmp.ne.s32.totalorder %s148, %s150
      %p154 = scmp.eq.s32.totalorder %s25, 0
      %p155 = por %p153, %p154
      %p156 = scmp.ne.s32.totalorder %s148, %s150
      %p157 = scmp.eq.s32.totalorder %s30, 2
      %p158 = por %p156, %p157
      %p159 = scmp.ne.s32.totalorder %s150, %s151
      %p160 = scmp.eq.s32.totalorder %s30, 0
      %p161 = por %p159, %p160
      %p162 = scmp.ne.s32.totalorder %s150, %s151
      %p163 = scmp.eq.s32.totalorder %s31, 2
      %p164 = por %p162, %p163
      %p166 = scmp.ne.s32.totalorder %s151, %s165
      %p167 = scmp.eq.s32.totalorder %s31, 0
      %p168 = por %p166, %p167
      %s170 = sadd.s32 %s169, 1
      %p173 = scmp.eq.s32.totalorder %s25, 2
      %p174 = scmp.ne.s32.totalorder %s169, %s171
      %p175 = scmp.eq.s32.totalorder %s25, 0
      %p176 = por %p174, %p175
      %p177 = scmp.ne.s32.totalorder %s169, %s171
      %p178 = scmp.eq.s32.totalorder %s30, 2
      %p179 = por %p177, %p178
      %p180 = scmp.ne.s32.totalorder %s171, %s172
      %p181 = scmp.eq.s32.totalorder %s30, 0
      %p182 = por %p180, %p181
      %p183 = scmp.ne.s32.totalorder %s171, %s172
      %p184 = scmp.eq.s32.totalorder %s31, 2
      %p185 = por %p183, %p184
      %p187 = scmp.ne.s32.totalorder %s172, %s186
      %p188 = scmp.eq.s32.totalorder %s31, 0
      %p189 = por %p187, %p188
      %s191 = sadd.s32 %s190, 1
      %p194 = scmp.eq.s32.totalorder %s25, 2
      %p195 = scmp.ne.s32.totalorder %s190, %s192
      %p196 = scmp.eq.s32.totalorder %s25, 0
      %p197 = por %p195, %p196
      %p198 = scmp.ne.s32.totalorder %s190, %s192
      %p199 = scmp.eq.s32.totalorder %s30, 2
      %p200 = por %p198, %p199
      %p201 = scmp.ne.s32.totalorder %s192, %s193
      %p202 = scmp.eq.s32.totalorder %s30, 0
      %p203 = por %p201, %p202
      %p204 = scmp.ne.s32.totalorder %s192, %s193
      %p205 = scmp.eq.s32.totalorder %s31, 2
      %p206 = por %p204, %p205
      %p208 = scmp.ne.s32.totalorder %s193, %s207
      %p209 = scmp.eq.s32.totalorder %s31, 0
      %p210 = por %p208, %p209
      %s212 = sadd.s32 %s211, 1
      %p215 = scmp.eq.s32.totalorder %s25, 2
      %p216 = scmp.ne.s32.totalorder %s211, %s213
      %p217 = scmp.eq.s32.totalorder %s25, 0
      %p218 = por %p216, %p217
      %p219 = scmp.ne.s32.totalorder %s211, %s213
      %p220 = scmp.eq.s32.totalorder %s30, 2
      %p221 = por %p219, %p220
      %p222 = scmp.ne.s32.totalorder %s213, %s214
      %p223 = scmp.eq.s32.totalorder %s30, 0
      %p224 = por %p222, %p223
      %p225 = scmp.ne.s32.totalorder %s213, %s214
      %p226 = scmp.eq.s32.totalorder %s31, 2
      %p227 = por %p225, %p226
      %p229 = scmp.ne.s32.totalorder %s214, %s228
      %p230 = scmp.eq.s32.totalorder %s31, 0
      %p231 = por %p229, %p230
      %s233 = sadd.s32 %s232, 1
      %p236 = scmp.eq.s32.totalorder %s25, 2
      %p237 = scmp.ne.s32.totalorder %s232, %s234
      %p238 = scmp.eq.s32.totalorder %s25, 0
      %p239 = por %p237, %p238
      %p240 = scmp.ne.s32.totalorder %s232, %s234
      %p241 = scmp.eq.s32.totalorder %s30, 2
      %p242 = por %p240, %p241
      %p243 = scmp.ne.s32.totalorder %s234, %s235
      %p244 = scmp.eq.s32.totalorder %s30, 0
      %p245 = por %p243, %p244
      %p246 = scmp.ne.s32.totalorder %s234, %s235
      %p247 = scmp.eq.s32.totalorder %s31, 2
      %p248 = por %p246, %p247
      %p250 = scmp.ne.s32.totalorder %s235, %s249
      %p251 = scmp.eq.s32.totalorder %s31, 0
      %p252 = por %p250, %p251
      %s254 = sadd.s32 %s253, 1
      %p257 = scmp.eq.s32.totalorder %s25, 2
      %p258 = scmp.ne.s32.totalorder %s253, %s255
      %p259 = scmp.eq.s32.totalorder %s25, 0
      %p260 = por %p258, %p259
      %p261 = scmp.ne.s32.totalorder %s253, %s255
      %p262 = scmp.eq.s32.totalorder %s30, 2
      %p263 = por %p261, %p262
      %p264 = scmp.ne.s32.totalorder %s255, %s256
      %p265 = scmp.eq.s32.totalorder %s30, 0
      %p266 = por %p264, %p265
      %p267 = scmp.ne.s32.totalorder %s255, %s256
      %p268 = scmp.eq.s32.totalorder %s31, 2
      %p269 = por %p267, %p268
      %p271 = scmp.ne.s32.totalorder %s256, %s270
      %p272 = scmp.eq.s32.totalorder %s31, 0
      %p273 = por %p271, %p272
      %s275 = sadd.s32 %s274, 1
      %p278 = scmp.eq.s32.totalorder %s25, 2
      %p279 = scmp.ne.s32.totalorder %s274, %s276
      %p280 = scmp.eq.s32.totalorder %s25, 0
      %p281 = por %p279, %p280
      %p282 = scmp.ne.s32.totalorder %s274, %s276
      %p283 = scmp.eq.s32.totalorder %s30, 2
      %p284 = por %p282, %p283
      %p285 = scmp.ne.s32.totalorder %s276, %s277
      %p286 = scmp.eq.s32.totalorder %s30, 0
      %p287 = por %p285, %p286
      %p288 = scmp.ne.s32.totalorder %s276, %s277
      %p289 = scmp.eq.s32.totalorder %s31, 2
      %p290 = por %p288, %p289
      %p292 = scmp.ne.s32.totalorder %s277, %s291
      %p293 = scmp.eq.s32.totalorder %s31, 0
      %p294 = por %p292, %p293
      %s296 = sadd.s32 %s295, 1
      %p299 = scmp.eq.s32.totalorder %s25, 2
      %p300 = scmp.ne.s32.totalorder %s295, %s297
      %p301 = scmp.eq.s32.totalorder %s25, 0
      %p302 = por %p300, %p301
      %p303 = scmp.ne.s32.totalorder %s295, %s297
      %p304 = scmp.eq.s32.totalorder %s30, 2
      %p305 = por %p303, %p304
      %p306 = scmp.ne.s32.totalorder %s297, %s298
      %p307 = scmp.eq.s32.totalorder %s30, 0
      %p308 = por %p306, %p307
      %p309 = scmp.ne.s32.totalorder %s297, %s298
      %p310 = scmp.eq.s32.totalorder %s31, 2
      %p311 = por %p309, %p310
      %p313 = scmp.ne.s32.totalorder %s298, %s312
      %p314 = scmp.eq.s32.totalorder %s31, 0
      %p315 = por %p313, %p314
      %s317 = sadd.s32 %s316, 1
      %p320 = scmp.eq.s32.totalorder %s25, 2
      %p321 = scmp.ne.s32.totalorder %s316, %s318
      %p322 = scmp.eq.s32.totalorder %s25, 0
      %p323 = por %p321, %p322
      %p324 = scmp.ne.s32.totalorder %s316, %s318
      %p325 = scmp.eq.s32.totalorder %s30, 2
      %p326 = por %p324, %p325
      %p327 = scmp.ne.s32.totalorder %s318, %s319
      %p328 = scmp.eq.s32.totalorder %s30, 0
      %p329 = por %p327, %p328
      %p330 = scmp.ne.s32.totalorder %s318, %s319
      %p331 = scmp.eq.s32.totalorder %s31, 2
      %p332 = por %p330, %p331
      %p334 = scmp.ne.s32.totalorder %s319, %s333
      %p335 = scmp.eq.s32.totalorder %s31, 0
      %p336 = por %p334, %p335
      %s338 = sadd.s32 %s337, 1
      %p341 = scmp.eq.s32.totalorder %s25, 2
      %p342 = scmp.ne.s32.totalorder %s337, %s339
      %p343 = scmp.eq.s32.totalorder %s25, 0
      %p344 = por %p342, %p343
      %p345 = scmp.ne.s32.totalorder %s337, %s339
      %p346 = scmp.eq.s32.totalorder %s30, 2
      %p347 = por %p345, %p346
      %p348 = scmp.ne.s32.totalorder %s339, %s340
      %p349 = scmp.eq.s32.totalorder %s30, 0
      %p350 = por %p348, %p349
      %p351 = scmp.ne.s32.totalorder %s339, %s340
      %p352 = scmp.eq.s32.totalorder %s31, 2
      %p353 = por %p351, %p352
      %p355 = scmp.ne.s32.totalorder %s340, %s354
      %p356 = scmp.eq.s32.totalorder %s31, 0
      %p357 = por %p355, %p356
      %s359 = sadd.s32 %s358, 1
      %p362 = scmp.eq.s32.totalorder %s25, 2
      %p363 = scmp.ne.s32.totalorder %s358, %s360
      %p364 = scmp.eq.s32.totalorder %s25, 0
      %p365 = por %p363, %p364
      %p366 = scmp.ne.s32.totalorder %s358, %s360
      %p367 = scmp.eq.s32.totalorder %s30, 2
      %p368 = por %p366, %p367
      %p369 = scmp.ne.s32.totalorder %s360, %s361
      %p370 = scmp.eq.s32.totalorder %s30, 0
      %p371 = por %p369, %p370
      %p372 = scmp.ne.s32.totalorder %s360, %s361
      %p373 = scmp.eq.s32.totalorder %s31, 2
      %p374 = por %p372, %p373
      %p376 = scmp.ne.s32.totalorder %s361, %s375
      %p377 = scmp.eq.s32.totalorder %s31, 0
      %p378 = por %p376, %p377
      %p379 = scmp.le.s32.totalorder 1, %s25
      %p380 = scmp.lt.s32.totalorder %s25, 4
      %p381 = pnand %p379, %p380
      %p382 = pneg %p381
      // Predicated region
      $region9: #{tpu_custom_call.1} parent=5 // pred_check
        _
      $region10: #{tpu_custom_call.1} parent=5 // pred_check_branch
        %384 = sbr.rel (%p381) target = $region12
      $region11: #{tpu_custom_call.1} parent=5 // pred_region
        %s385 = ssub.s32 %s25, 1
        // Predicated region
        $region13: #{tpu_custom_call.1} parent=11 // pred_check
          %p386 = pneg %p98
        $region14: #{tpu_custom_call.1} parent=11 // pred_check_branch
          %388 = sbr.rel (%p386) target = $region16
        $region15: #{tpu_custom_call.1} parent=11 // pred_region
          _
        $region16: #{tpu_custom_call.1} parent=11 // pred_fallthru
          _
        // Predicated region
        $region17: #{tpu_custom_call.1} parent=11 // pred_check
          %p389 = pneg %p119
        $region18: #{tpu_custom_call.1} parent=11 // pred_check_branch
          %391 = sbr.rel (%p389) target = $region20
        $region19: #{tpu_custom_call.1} parent=11 // pred_region
          _
        $region20: #{tpu_custom_call.1} parent=11 // pred_fallthru
          _
        // Predicated region
        $region21: #{tpu_custom_call.1} parent=11 // pred_check
          %p392 = pneg %p140
        $region22: #{tpu_custom_call.1} parent=11 // pred_check_branch
          %394 = sbr.rel (%p392) target = $region24
        $region23: #{tpu_custom_call.1} parent=11 // pred_region
          _
        $region24: #{tpu_custom_call.1} parent=11 // pred_fallthru
          _
        // Predicated region
        $region25: #{tpu_custom_call.1} parent=11 // pred_check
          %p395 = pneg %p161
        $region26: #{tpu_custom_call.1} parent=11 // pred_check_branch
          %397 = sbr.rel (%p395) target = $region28
        $region27: #{tpu_custom_call.1} parent=11 // pred_region
          _
        $region28: #{tpu_custom_call.1} parent=11 // pred_fallthru
          _
        // Predicated region
        $region29: #{tpu_custom_call.1} parent=11 // pred_check
          %p398 = pneg %p182
        $region30: #{tpu_custom_call.1} parent=11 // pred_check_branch
          %400 = sbr.rel (%p398) target = $region32
        $region31: #{tpu_custom_call.1} parent=11 // pred_region
          _
        $region32: #{tpu_custom_call.1} parent=11 // pred_fallthru
          _
        // Predicated region
        $region33: #{tpu_custom_call.1} parent=11 // pred_check
          %p401 = pneg %p203
        $region34: #{tpu_custom_call.1} parent=11 // pred_check_branch
          %403 = sbr.rel (%p401) target = $region36
        $region35: #{tpu_custom_call.1} parent=11 // pred_region
          _
        $region36: #{tpu_custom_call.1} parent=11 // pred_fallthru
          _
        // Predicated region
        $region37: #{tpu_custom_call.1} parent=11 // pred_check
          %p404 = pneg %p224
        $region38: #{tpu_custom_call.1} parent=11 // pred_check_branch
          %406 = sbr.rel (%p404) target = $region40
        $region39: #{tpu_custom_call.1} parent=11 // pred_region
          %s408 = ssub.s32 2048, 2048
          %409 = vsyncadd [#allocation5], %s408
          %s410 = sshll.u32 [#allocation4], 4
          %s411 = int_to_ptr.vmem [resolvable:$true] %s410
          %416 = dma.hbm_to_vmem [thread:$0]  %s8, 2048, %s411, [#allocation5], 128, 128, 8
        $region40: #{tpu_custom_call.1} parent=11 // pred_fallthru
          _
        // Predicated region
        $region41: #{tpu_custom_call.1} parent=11 // pred_check
          %p417 = pneg %p245
        $region42: #{tpu_custom_call.1} parent=11 // pred_check_branch
          %419 = sbr.rel (%p417) target = $region44
        $region43: #{tpu_custom_call.1} parent=11 // pred_region
          _
        $region44: #{tpu_custom_call.1} parent=11 // pred_fallthru
          _
        // Predicated region
        $region45: #{tpu_custom_call.1} parent=11 // pred_check
          %p420 = pneg %p266
        $region46: #{tpu_custom_call.1} parent=11 // pred_check_branch
          %422 = sbr.rel (%p420) target = $region48
        $region47: #{tpu_custom_call.1} parent=11 // pred_region
          %s424 = ssub.s32 2048, 2048
          %425 = vsyncadd [#allocation8], %s424
          %s426 = sshll.u32 [#allocation7], 4
          %s427 = int_to_ptr.vmem [resolvable:$true] %s426
          %432 = dma.hbm_to_vmem [thread:$0]  %s10, 2048, %s427, [#allocation8], 128, 128, 8
        $region48: #{tpu_custom_call.1} parent=11 // pred_fallthru
          _
        // Predicated region
        $region49: #{tpu_custom_call.1} parent=11 // pred_check
          %p433 = pneg %p287
        $region50: #{tpu_custom_call.1} parent=11 // pred_check_branch
          %435 = sbr.rel (%p433) target = $region52
        $region51: #{tpu_custom_call.1} parent=11 // pred_region
          _
        $region52: #{tpu_custom_call.1} parent=11 // pred_fallthru
          _
        // Predicated region
        $region53: #{tpu_custom_call.1} parent=11 // pred_check
          %p436 = pneg %p308
        $region54: #{tpu_custom_call.1} parent=11 // pred_check_branch
          %438 = sbr.rel (%p436) target = $region56
        $region55: #{tpu_custom_call.1} parent=11 // pred_region
          %s440 = ssub.s32 2048, 2048
          %441 = vsyncadd [#allocation8], %s440
          %s442 = sshll.u32 [#allocation9], 4
          %s443 = int_to_ptr.vmem [resolvable:$true] %s442
          %448 = dma.hbm_to_vmem [thread:$0]  %s12, 2048, %s443, [#allocation8], 128, 128, 8
        $region56: #{tpu_custom_call.1} parent=11 // pred_fallthru
          _
        // Predicated region
        $region57: #{tpu_custom_call.1} parent=11 // pred_check
          %p449 = pneg %p329
        $region58: #{tpu_custom_call.1} parent=11 // pred_check_branch
          %451 = sbr.rel (%p449) target = $region60
        $region59: #{tpu_custom_call.1} parent=11 // pred_region
          _
        $region60: #{tpu_custom_call.1} parent=11 // pred_fallthru
          _
        // Predicated region
        $region61: #{tpu_custom_call.1} parent=11 // pred_check
          %p452 = pneg %p350
        $region62: #{tpu_custom_call.1} parent=11 // pred_check_branch
          %454 = sbr.rel (%p452) target = $region64
        $region63: #{tpu_custom_call.1} parent=11 // pred_region
          _
        $region64: #{tpu_custom_call.1} parent=11 // pred_fallthru
          _
      $region12: #{tpu_custom_call.1} parent=5 // pred_fallthru
        _
      %p455 = scmp.lt.s32.totalorder %s25, 3
      // Predicated region
      $region65: #{tpu_custom_call.1} parent=5 // pred_check
        %p456 = pneg %p455
      $region66: #{tpu_custom_call.1} parent=5 // pred_check_branch
        %458 = sbr.rel (%p456) target = $region68
      $region67: #{tpu_custom_call.1} parent=5 // pred_region
        // Predicated region
        $region69: #{tpu_custom_call.1} parent=67 // pred_check
          %p459 = pneg %p45
        $region70: #{tpu_custom_call.1} parent=67 // pred_check_branch
          %461 = sbr.rel (%p459) target = $region72
        $region71: #{tpu_custom_call.1} parent=67 // pred_region
          %s462 = smul.u32 16, %s25
          %p463 = scmp.lt.s32.totalorder %s462, 47
          %s464 = scalar_select %p463, %s462, 47
          %s465 = smul.addr %s464, 8
          %s466 = scalar_lea.vmem %s0, %s465
          %s467 = smul.u32 16, %s25
        $region72: #{tpu_custom_call.1} parent=67 // pred_fallthru
          _
        // Predicated region
        $region73: #{tpu_custom_call.1} parent=67 // pred_check
          %p468 = pneg %p71
        $region74: #{tpu_custom_call.1} parent=67 // pred_check_branch
          %470 = sbr.rel (%p468) target = $region76
        $region75: #{tpu_custom_call.1} parent=67 // pred_region
          %p471 = scmp.lt.s32.totalorder %s25, 2
          %s472 = scalar_select %p471, %s25, 2
          %s473 = scalar_lea.vmem %s1, %s472
        $region76: #{tpu_custom_call.1} parent=67 // pred_fallthru
          _
      $region68: #{tpu_custom_call.1} parent=5 // pred_fallthru
        _
      %p474 = scmp.le.s32.totalorder 1, %s25
      %p475 = scmp.lt.s32.totalorder %s25, 4
      %p476 = pnand %p474, %p475
      %p477 = pneg %p476
      // Predicated region
      $region77: #{tpu_custom_call.1} parent=5 // pred_check
        _
      $region78: #{tpu_custom_call.1} parent=5 // pred_check_branch
        %479 = sbr.rel (%p476) target = $region80
      $region79: #{tpu_custom_call.1} parent=5 // pred_region
        %s480 = ssub.s32 %s25, 1
        // Predicated region
        $region81: #{tpu_custom_call.1} parent=79 // pred_check
          %p481 = pneg %p224
        $region82: #{tpu_custom_call.1} parent=79 // pred_check_branch
          %483 = sbr.rel (%p481) target = $region84
        $region83: #{tpu_custom_call.1} parent=79 // pred_region
          %484 = dma.done [#allocation5], 2048
        $region84: #{tpu_custom_call.1} parent=79 // pred_fallthru
          _
        // Predicated region
        $region85: #{tpu_custom_call.1} parent=79 // pred_check
          %p485 = pneg %p266
        $region86: #{tpu_custom_call.1} parent=79 // pred_check_branch
          %487 = sbr.rel (%p485) target = $region88
        $region87: #{tpu_custom_call.1} parent=79 // pred_region
          %488 = dma.done [#allocation8], 2048
        $region88: #{tpu_custom_call.1} parent=79 // pred_fallthru
          _
        // Predicated region
        $region89: #{tpu_custom_call.1} parent=79 // pred_check
          %p489 = pneg %p308
        $region90: #{tpu_custom_call.1} parent=79 // pred_check_branch
          %491 = sbr.rel (%p489) target = $region92
        $region91: #{tpu_custom_call.1} parent=79 // pred_region
          %492 = dma.done [#allocation8], 2048
        $region92: #{tpu_custom_call.1} parent=79 // pred_fallthru
          _
        %s493 = smul.u32 16, %s30
        %p494 = scmp.lt.s32.totalorder %s493, 47
        %s495 = scalar_select %p494, %s493, 47
        %s496 = smul.addr %s495, 8
        %s497 = scalar_lea.vmem %s0, %s496
        %p498 = pneg %p51
        %p499 = pneg %p48
        %p500 = scmp.lt.s32.totalorder %s30, 2
        %s501 = scalar_select %p500, %s30, 2
        %s502 = scalar_lea.vmem %s1, %s501
        %p503 = pneg %p77
        %p504 = pneg %p74
        %p505 = pneg %p98
        %p506 = pneg %p95
        %p507 = pneg %p119
        %p508 = pneg %p116
        %p509 = pneg %p140
        %p510 = pneg %p137
        %p511 = pneg %p161
        %p512 = pneg %p158
        %p513 = pneg %p182
        %p514 = pneg %p179
        %p515 = pneg %p203
        %p516 = pneg %p200
        %p517 = pneg %p224
        %p518 = pneg %p221
        %p519 = pneg %p245
        %p520 = pneg %p242
        %p521 = pneg %p266
        %p522 = pneg %p263
        %p523 = pneg %p287
        %p524 = pneg %p284
        %p525 = pneg %p308
        %p526 = pneg %p305
        %p527 = pneg %p329
        %p528 = pneg %p326
        %p529 = pneg %p350
        %p530 = pneg %p347
        %p531 = pneg %p371
        %p532 = pneg %p368
        %s533 = smul.u32 16, %s30
        %p534 = scmp.lt.s32.totalorder %s533, 47
        %s535 = scalar_select %p534, %s533, 47
        %s536 = smul.addr %s535, 8
        %s537 = scalar_lea.vmem %s0, %s536
        %s538 = smul.u32 16, %s30
        %p539 = scmp.lt.s32.totalorder %s30, 2
        %s540 = scalar_select %p539, %s30, 2
        %s541 = scalar_lea.vmem %s1, %s540
        %p542 = scmp.eq.s32.totalorder %s30, 0
        // Predicated region
        $region93: #{tpu_custom_call.1} parent=79 // pred_check
          %p543 = pneg %p542
        $region94: #{tpu_custom_call.1} parent=79 // pred_check_branch
          %545 = sbr.rel (%p543) target = $region96
        $region95: #{tpu_custom_call.1} parent=79 // pred_region
          %546 = vst [vmem:[#allocation2] sm:$0xff] 0.0
        $region96: #{tpu_custom_call.1} parent=79 // pred_fallthru
          _
        %v547 = vld [vmem:[%s537] sm:$0xff]
        %v548 = vld [vmem:[%s537 + $0x8] sm:$0xff]
        %v549 = vld [vmem:[%s537 + $0x10] sm:$0xff]
        %v550 = vld [vmem:[%s537 + $0x18] sm:$0xff]
        %v551 = vld [vmem:[%s537 + $0x20] sm:$0xff]
        %v552 = vld [vmem:[%s537 + $0x28] sm:$0xff]
        %v553 = vld [vmem:[%s537 + $0x30] sm:$0xff]
        %v554 = vld [vmem:[%s537 + $0x38] sm:$0xff]
        %v555 = vld [vmem:[%s537 + $0x40] sm:$0xff]
        %v556 = vld [vmem:[%s537 + $0x48] sm:$0xff]
        %v557 = vld [vmem:[%s537 + $0x50] sm:$0xff]
        %v558 = vld [vmem:[%s537 + $0x58] sm:$0xff]
        %v559 = vld [vmem:[%s537 + $0x60] sm:$0xff]
        %v560 = vld [vmem:[%s537 + $0x68] sm:$0xff]
        %v561 = vld [vmem:[%s537 + $0x70] sm:$0xff]
        %v562 = vld [vmem:[%s537 + $0x78] sm:$0xff]
        %v563 = vld [vmem:[%s2] sm:$0xff]
        %v564 = vld [vmem:[%s3] sm:$0x1]
        %v566 = vlaneseq
        %v567 = vshrl.u32 %v566, 7
        %v568 = vsub.s32 0, %v567
        %v569 = vrot.slane %v564, %v568
        %vm571 = vcmask 64512
        %v573 = vsel %vm571, %v547, 0
        %v576 = vsel %vm571, %v548, 0
        %v579 = vsel %vm571, %v549, 0
        %v582 = vsel %vm571, %v550, 0
        %v585 = vsel %vm571, %v551, 0
        %v588 = vsel %vm571, %v552, 0
        %v591 = vsel %vm571, %v553, 0
        %v594 = vsel %vm571, %v554, 0
        %v597 = vsel %vm571, %v555, 0
        %v600 = vsel %vm571, %v556, 0
        %v603 = vsel %vm571, %v557, 0
        %v606 = vsel %vm571, %v558, 0
        %v609 = vsel %vm571, %v559, 0
        %v612 = vsel %vm571, %v560, 0
        %v615 = vsel %vm571, %v561, 0
        %v618 = vsel %vm571, %v562, 0
        %620 = vmatprep.subr.mxu0 0.0
        %621 = vmatpush1.msra.mxu0 0.0
        %622 = vmatprep.subr.mxu0 0.0
        %623 = vmatpush1.msra.mxu0 0.0
        %624 = vmatprep.subr.mxu0 0.0
        %625 = vmatpush1.msra.mxu0 0.0
        %626 = vmatprep.subr.mxu0 0.0
        %627 = vmatpush1.msra.mxu0 0.0
        %628 = vmatprep.subr.mxu0 0.0
        %629 = vmatpush1.msra.mxu0 0.0
        %630 = vmatprep.subr.mxu0 0.0
        %631 = vmatpush1.msra.mxu0 0.0
        %632 = vmatprep.subr.mxu0 0.0
        %633 = vmatpush1.msra.mxu0 0.0
        %634 = vmatprep.subr.mxu0 0.0
        %635 = vmatpush1.msra.mxu0 0.0
        %636 = vmatprep.subr.mxu0 0.0
        %637 = vmatpush1.msra.mxu0 0.0
        %638 = vmatprep.subr.mxu0 0.0
        %639 = vmatpush1.msra.mxu0 0.0
        %640 = vmatprep.subr.mxu0 0.0
        %641 = vmatpush1.msra.mxu0 0.0
        %642 = vmatprep.subr.mxu0 0.0
        %643 = vmatpush1.msra.mxu0 0.0
        %644 = vmatprep.subr.mxu0 0.0
        %645 = vmatpush1.msra.mxu0 0.0
        %646 = vmatprep.subr.mxu0 0.0
        %647 = vmatpush1.msra.mxu0 0.0
        %648 = vmatprep.subr.mxu0 0.0
        %649 = vmatpush1.msra.mxu0 0.0
        %650 = vmatprep.subr.mxu0 0.0
        %651 = vmatpush1.msra.mxu0 %v563
        %652 = vmatprep.subr.mxu0 0.0
        %653 = vmatpush2.msra.mxu0 0.0
        %654 = vmatprep.subr.mxu0 0.0
        %655 = vmatpush2.msra.mxu0 0.0
        %656 = vmatprep.subr.mxu0 0.0
        %657 = vmatpush2.msra.mxu0 0.0
        %658 = vmatprep.subr.mxu0 0.0
        %659 = vmatpush2.msra.mxu0 0.0
        %660 = vmatprep.subr.mxu0 0.0
        %661 = vmatpush2.msra.mxu0 0.0
        %662 = vmatprep.subr.mxu0 0.0
        %663 = vmatpush2.msra.mxu0 0.0
        %664 = vmatprep.subr.mxu0 0.0
        %665 = vmatpush2.msra.mxu0 0.0
        %666 = vmatprep.subr.mxu0 0.0
        %667 = vmatpush2.msra.mxu0 0.0
        %668 = vmatprep.subr.mxu0 0.0
        %669 = vmatpush2.msra.mxu0 0.0
        %670 = vmatprep.subr.mxu0 0.0
        %671 = vmatpush2.msra.mxu0 0.0
        %672 = vmatprep.subr.mxu0 0.0
        %673 = vmatpush2.msra.mxu0 0.0
        %674 = vmatprep.subr.mxu0 0.0
        %675 = vmatpush2.msra.mxu0 0.0
        %676 = vmatprep.subr.mxu0 0.0
        %677 = vmatpush2.msra.mxu0 0.0
        %678 = vmatprep.subr.mxu0 0.0
        %679 = vmatpush2.msra.mxu0 0.0
        %680 = vmatprep.subr.mxu0 0.0
        %681 = vmatpush2.msra.mxu0 0.0
        %682 = vmatprep.subr.mxu0 0.0
        %683 = vmatpush2.msra.mxu0 0.0
        %684 = vmatprep.mubr.f32.mxu0 0.0
        %685 = vmatmul.mubr.f32.gmra.mxu0 %v573
        %v686 = vpop.f32.mrf.mxu0
        %v687 = vadd.f32 %v569, %v686
        %v688 = vpop.f32.mrf.mxu0
        %689 = vmatprep.mubr.f32.mxu0 0.0
        %690 = vmatmul.mubr.f32.gmra.mxu0 %v576
        %v691 = vpop.f32.mrf.mxu0
        %v692 = vadd.f32 %v569, %v691
        %v693 = vpop.f32.mrf.mxu0
        %694 = vmatprep.mubr.f32.mxu0 0.0
        %695 = vmatmul.mubr.f32.gmra.mxu0 %v579
        %v696 = vpop.f32.mrf.mxu0
        %v697 = vadd.f32 %v569, %v696
        %v698 = vpop.f32.mrf.mxu0
        %699 = vmatprep.mubr.f32.mxu0 0.0
        %700 = vmatmul.mubr.f32.gmra.mxu0 %v582
        %v701 = vpop.f32.mrf.mxu0
        %v702 = vadd.f32 %v569, %v701
        %v703 = vpop.f32.mrf.mxu0
        %704 = vmatprep.mubr.f32.mxu0 0.0
        %705 = vmatmul.mubr.f32.gmra.mxu0 %v585
        %v706 = vpop.f32.mrf.mxu0
        %v707 = vadd.f32 %v569, %v706
        %v708 = vpop.f32.mrf.mxu0
        %709 = vmatprep.mubr.f32.mxu0 0.0
        %710 = vmatmul.mubr.f32.gmra.mxu0 %v588
        %v711 = vpop.f32.mrf.mxu0
        %v712 = vadd.f32 %v569, %v711
        %v713 = vpop.f32.mrf.mxu0
        %714 = vmatprep.mubr.f32.mxu0 0.0
        %715 = vmatmul.mubr.f32.gmra.mxu0 %v591
        %v716 = vpop.f32.mrf.mxu0
        %v717 = vadd.f32 %v569, %v716
        %v718 = vpop.f32.mrf.mxu0
        %719 = vmatprep.mubr.f32.mxu0 0.0
        %720 = vmatmul.mubr.f32.gmra.mxu0 %v594
        %v721 = vpop.f32.mrf.mxu0
        %v722 = vadd.f32 %v569, %v721
        %v723 = vpop.f32.mrf.mxu0
        %724 = vmatprep.mubr.f32.mxu0 0.0
        %725 = vmatmul.mubr.f32.gmra.mxu0 %v597
        %v726 = vpop.f32.mrf.mxu0
        %v727 = vadd.f32 %v569, %v726
        %v728 = vpop.f32.mrf.mxu0
        %729 = vmatprep.mubr.f32.mxu0 0.0
        %730 = vmatmul.mubr.f32.gmra.mxu0 %v600
        %v731 = vpop.f32.mrf.mxu0
        %v732 = vadd.f32 %v569, %v731
        %v733 = vpop.f32.mrf.mxu0
        %734 = vmatprep.mubr.f32.mxu0 0.0
        %735 = vmatmul.mubr.f32.gmra.mxu0 %v603
        %v736 = vpop.f32.mrf.mxu0
        %v737 = vadd.f32 %v569, %v736
        %v738 = vpop.f32.mrf.mxu0
        %739 = vmatprep.mubr.f32.mxu0 0.0
        %740 = vmatmul.mubr.f32.gmra.mxu0 %v606
        %v741 = vpop.f32.mrf.mxu0
        %v742 = vadd.f32 %v569, %v741
        %v743 = vpop.f32.mrf.mxu0
        %744 = vmatprep.mubr.f32.mxu0 0.0
        %745 = vmatmul.mubr.f32.gmra.mxu0 %v609
        %v746 = vpop.f32.mrf.mxu0
        %v747 = vadd.f32 %v569, %v746
        %v748 = vpop.f32.mrf.mxu0
        %749 = vmatprep.mubr.f32.mxu0 0.0
        %750 = vmatmul.mubr.f32.gmra.mxu0 %v612
        %v751 = vpop.f32.mrf.mxu0
        %v752 = vadd.f32 %v569, %v751
        %v753 = vpop.f32.mrf.mxu0
        %754 = vmatprep.mubr.f32.mxu0 0.0
        %755 = vmatmul.mubr.f32.gmra.mxu0 %v615
        %v756 = vpop.f32.mrf.mxu0
        %v757 = vadd.f32 %v569, %v756
        %v758 = vpop.f32.mrf.mxu0
        %759 = vmatprep.mubr.f32.mxu0 0.0
        %760 = vmatmul.mubr.f32.gmra.mxu0 %v618
        %v761 = vpop.f32.mrf.mxu0
        %v762 = vadd.f32 %v569, %v761
        %v763 = vpop.f32.mrf.mxu0
        %764 = vdwg.mxu0
        %v765 = vmax.f32 %v687, 0.0
        %v766 = vmax.f32 %v692, 0.0
        %v767 = vmax.f32 %v697, 0.0
        %v768 = vmax.f32 %v702, 0.0
        %v769 = vmax.f32 %v707, 0.0
        %v770 = vmax.f32 %v712, 0.0
        %v771 = vmax.f32 %v717, 0.0
        %v772 = vmax.f32 %v722, 0.0
        %v773 = vmax.f32 %v727, 0.0
        %v774 = vmax.f32 %v732, 0.0
        %v775 = vmax.f32 %v737, 0.0
        %v776 = vmax.f32 %v742, 0.0
        %v777 = vmax.f32 %v747, 0.0
        %v778 = vmax.f32 %v752, 0.0
        %v779 = vmax.f32 %v757, 0.0
        %v780 = vmax.f32 %v762, 0.0
        %v781 = vld [vmem:[%s4] sm:$0xff]
        %v782 = vld [vmem:[%s4 + $0x8] sm:$0xff]
        %v783 = vld [vmem:[%s4 + $0x10] sm:$0xff]
        %v784 = vld [vmem:[%s4 + $0x18] sm:$0xff]
        %v785 = vld [vmem:[%s4 + $0x20] sm:$0xff]
        %v786 = vld [vmem:[%s4 + $0x28] sm:$0xff]
        %v787 = vld [vmem:[%s4 + $0x30] sm:$0xff]
        %v788 = vld [vmem:[%s4 + $0x38] sm:$0xff]
        %v789 = vld [vmem:[%s4 + $0x40] sm:$0xff]
        %v790 = vld [vmem:[%s4 + $0x48] sm:$0xff]
        %v791 = vld [vmem:[%s4 + $0x50] sm:$0xff]
        %v792 = vld [vmem:[%s4 + $0x58] sm:$0xff]
        %v793 = vld [vmem:[%s4 + $0x60] sm:$0xff]
        %v794 = vld [vmem:[%s4 + $0x68] sm:$0xff]
        %v795 = vld [vmem:[%s4 + $0x70] sm:$0xff]
        %v796 = vld [vmem:[%s4 + $0x78] sm:$0xff]
        %v797 = vld [vmem:[%s5] sm:$0x1]
        %v799 = vlaneseq
        %v800 = vshrl.u32 %v799, 7
        %v801 = vsub.s32 0, %v800
        %v802 = vrot.slane %v797, %v801
        %804 = vmatprep.subr.mxu0 0.0
        %805 = vmatpush1.msra.mxu0 %v796
        %806 = vmatprep.subr.mxu0 0.0
        %807 = vmatpush1.msra.mxu0 %v795
        %808 = vmatprep.subr.mxu0 0.0
        %809 = vmatpush1.msra.mxu0 %v794
        %810 = vmatprep.subr.mxu0 0.0
        %811 = vmatpush1.msra.mxu0 %v793
        %812 = vmatprep.subr.mxu0 0.0
        %813 = vmatpush1.msra.mxu0 %v792
        %814 = vmatprep.subr.mxu0 0.0
        %815 = vmatpush1.msra.mxu0 %v791
        %816 = vmatprep.subr.mxu0 0.0
        %817 = vmatpush1.msra.mxu0 %v790
        %818 = vmatprep.subr.mxu0 0.0
        %819 = vmatpush1.msra.mxu0 %v789
        %820 = vmatprep.subr.mxu0 0.0
        %821 = vmatpush1.msra.mxu0 %v788
        %822 = vmatprep.subr.mxu0 0.0
        %823 = vmatpush1.msra.mxu0 %v787
        %824 = vmatprep.subr.mxu0 0.0
        %825 = vmatpush1.msra.mxu0 %v786
        %826 = vmatprep.subr.mxu0 0.0
        %827 = vmatpush1.msra.mxu0 %v785
        %828 = vmatprep.subr.mxu0 0.0
        %829 = vmatpush1.msra.mxu0 %v784
        %830 = vmatprep.subr.mxu0 0.0
        %831 = vmatpush1.msra.mxu0 %v783
        %832 = vmatprep.subr.mxu0 0.0
        %833 = vmatpush1.msra.mxu0 %v782
        %834 = vmatprep.subr.mxu0 0.0
        %835 = vmatpush1.msra.mxu0 %v781
        %836 = vmatprep.subr.mxu0 0.0
        %837 = vmatpush2.msra.mxu0 0.0
        %838 = vmatprep.subr.mxu0 0.0
        %839 = vmatpush2.msra.mxu0 0.0
        %840 = vmatprep.subr.mxu0 0.0
        %841 = vmatpush2.msra.mxu0 0.0
        %842 = vmatprep.subr.mxu0 0.0
        %843 = vmatpush2.msra.mxu0 0.0
        %844 = vmatprep.subr.mxu0 0.0
        %845 = vmatpush2.msra.mxu0 0.0
        %846 = vmatprep.subr.mxu0 0.0
        %847 = vmatpush2.msra.mxu0 0.0
        %848 = vmatprep.subr.mxu0 0.0
        %849 = vmatpush2.msra.mxu0 0.0
        %850 = vmatprep.subr.mxu0 0.0
        %851 = vmatpush2.msra.mxu0 0.0
        %852 = vmatprep.subr.mxu0 0.0
        %853 = vmatpush2.msra.mxu0 0.0
        %854 = vmatprep.subr.mxu0 0.0
        %855 = vmatpush2.msra.mxu0 0.0
        %856 = vmatprep.subr.mxu0 0.0
        %857 = vmatpush2.msra.mxu0 0.0
        %858 = vmatprep.subr.mxu0 0.0
        %859 = vmatpush2.msra.mxu0 0.0
        %860 = vmatprep.subr.mxu0 0.0
        %861 = vmatpush2.msra.mxu0 0.0
        %862 = vmatprep.subr.mxu0 0.0
        %863 = vmatpush2.msra.mxu0 0.0
        %864 = vmatprep.subr.mxu0 0.0
        %865 = vmatpush2.msra.mxu0 0.0
        %866 = vmatprep.subr.mxu0 0.0
        %867 = vmatpush2.msra.mxu0 0.0
        %868 = vmatprep.mubr.f32.mxu0 0.0
        %869 = vmatmul.mubr.f32.gmra.mxu0 %v765
        %v870 = vpop.f32.mrf.mxu0
        %v871 = vadd.f32 %v802, %v870
        %v872 = vpop.f32.mrf.mxu0
        %873 = vmatprep.mubr.f32.mxu0 0.0
        %874 = vmatmul.mubr.f32.gmra.mxu0 %v766
        %v875 = vpop.f32.mrf.mxu0
        %v876 = vadd.f32 %v802, %v875
        %v877 = vpop.f32.mrf.mxu0
        %878 = vmatprep.mubr.f32.mxu0 0.0
        %879 = vmatmul.mubr.f32.gmra.mxu0 %v767
        %v880 = vpop.f32.mrf.mxu0
        %v881 = vadd.f32 %v802, %v880
        %v882 = vpop.f32.mrf.mxu0
        %883 = vmatprep.mubr.f32.mxu0 0.0
        %884 = vmatmul.mubr.f32.gmra.mxu0 %v768
        %v885 = vpop.f32.mrf.mxu0
        %v886 = vadd.f32 %v802, %v885
        %v887 = vpop.f32.mrf.mxu0
        %888 = vmatprep.mubr.f32.mxu0 0.0
        %889 = vmatmul.mubr.f32.gmra.mxu0 %v769
        %v890 = vpop.f32.mrf.mxu0
        %v891 = vadd.f32 %v802, %v890
        %v892 = vpop.f32.mrf.mxu0
        %893 = vmatprep.mubr.f32.mxu0 0.0
        %894 = vmatmul.mubr.f32.gmra.mxu0 %v770
        %v895 = vpop.f32.mrf.mxu0
        %v896 = vadd.f32 %v802, %v895
        %v897 = vpop.f32.mrf.mxu0
        %898 = vmatprep.mubr.f32.mxu0 0.0
        %899 = vmatmul.mubr.f32.gmra.mxu0 %v771
        %v900 = vpop.f32.mrf.mxu0
        %v901 = vadd.f32 %v802, %v900
        %v902 = vpop.f32.mrf.mxu0
        %903 = vmatprep.mubr.f32.mxu0 0.0
        %904 = vmatmul.mubr.f32.gmra.mxu0 %v772
        %v905 = vpop.f32.mrf.mxu0
        %v906 = vadd.f32 %v802, %v905
        %v907 = vpop.f32.mrf.mxu0
        %908 = vmatprep.mubr.f32.mxu0 0.0
        %909 = vmatmul.mubr.f32.gmra.mxu0 %v773
        %v910 = vpop.f32.mrf.mxu0
        %v911 = vadd.f32 %v802, %v910
        %v912 = vpop.f32.mrf.mxu0
        %913 = vmatprep.mubr.f32.mxu0 0.0
        %914 = vmatmul.mubr.f32.gmra.mxu0 %v774
        %v915 = vpop.f32.mrf.mxu0
        %v916 = vadd.f32 %v802, %v915
        %v917 = vpop.f32.mrf.mxu0
        %918 = vmatprep.mubr.f32.mxu0 0.0
        %919 = vmatmul.mubr.f32.gmra.mxu0 %v775
        %v920 = vpop.f32.mrf.mxu0
        %v921 = vadd.f32 %v802, %v920
        %v922 = vpop.f32.mrf.mxu0
        %923 = vmatprep.mubr.f32.mxu0 0.0
        %924 = vmatmul.mubr.f32.gmra.mxu0 %v776
        %v925 = vpop.f32.mrf.mxu0
        %v926 = vadd.f32 %v802, %v925
        %v927 = vpop.f32.mrf.mxu0
        %928 = vmatprep.mubr.f32.mxu0 0.0
        %929 = vmatmul.mubr.f32.gmra.mxu0 %v777
        %v930 = vpop.f32.mrf.mxu0
        %v931 = vadd.f32 %v802, %v930
        %v932 = vpop.f32.mrf.mxu0
        %933 = vmatprep.mubr.f32.mxu0 0.0
        %934 = vmatmul.mubr.f32.gmra.mxu0 %v778
        %v935 = vpop.f32.mrf.mxu0
        %v936 = vadd.f32 %v802, %v935
        %v937 = vpop.f32.mrf.mxu0
        %938 = vmatprep.mubr.f32.mxu0 0.0
        %939 = vmatmul.mubr.f32.gmra.mxu0 %v779
        %v940 = vpop.f32.mrf.mxu0
        %v941 = vadd.f32 %v802, %v940
        %v942 = vpop.f32.mrf.mxu0
        %943 = vmatprep.mubr.f32.mxu0 0.0
        %944 = vmatmul.mubr.f32.gmra.mxu0 %v780
        %v945 = vpop.f32.mrf.mxu0
        %v946 = vadd.f32 %v802, %v945
        %v947 = vpop.f32.mrf.mxu0
        %948 = vdwg.mxu0
        %v949 = vmax.f32 %v871, 0.0
        %v950 = vmax.f32 %v876, 0.0
        %v951 = vmax.f32 %v881, 0.0
        %v952 = vmax.f32 %v886, 0.0
        %v953 = vmax.f32 %v891, 0.0
        %v954 = vmax.f32 %v896, 0.0
        %v955 = vmax.f32 %v901, 0.0
        %v956 = vmax.f32 %v906, 0.0
        %v957 = vmax.f32 %v911, 0.0
        %v958 = vmax.f32 %v916, 0.0
        %v959 = vmax.f32 %v921, 0.0
        %v960 = vmax.f32 %v926, 0.0
        %v961 = vmax.f32 %v931, 0.0
        %v962 = vmax.f32 %v936, 0.0
        %v963 = vmax.f32 %v941, 0.0
        %v964 = vmax.f32 %v946, 0.0
        %s965 = scalar_lea.vmem %s4, 128
        %v966 = vld [vmem:[%s965] sm:$0xff]
        %v967 = vld [vmem:[%s965 + $0x8] sm:$0xff]
        %v968 = vld [vmem:[%s965 + $0x10] sm:$0xff]
        %v969 = vld [vmem:[%s965 + $0x18] sm:$0xff]
        %v970 = vld [vmem:[%s965 + $0x20] sm:$0xff]
        %v971 = vld [vmem:[%s965 + $0x28] sm:$0xff]
        %v972 = vld [vmem:[%s965 + $0x30] sm:$0xff]
        %v973 = vld [vmem:[%s965 + $0x38] sm:$0xff]
        %v974 = vld [vmem:[%s965 + $0x40] sm:$0xff]
        %v975 = vld [vmem:[%s965 + $0x48] sm:$0xff]
        %v976 = vld [vmem:[%s965 + $0x50] sm:$0xff]
        %v977 = vld [vmem:[%s965 + $0x58] sm:$0xff]
        %v978 = vld [vmem:[%s965 + $0x60] sm:$0xff]
        %v979 = vld [vmem:[%s965 + $0x68] sm:$0xff]
        %v980 = vld [vmem:[%s965 + $0x70] sm:$0xff]
        %v981 = vld [vmem:[%s965 + $0x78] sm:$0xff]
        %s982 = scalar_lea.vmem %s5, 1
        %v983 = vld [vmem:[%s982] sm:$0x1]
        %v985 = vlaneseq
        %v986 = vshrl.u32 %v985, 7
        %v987 = vsub.s32 0, %v986
        %v988 = vrot.slane %v983, %v987
        %990 = vmatprep.subr.mxu0 0.0
        %991 = vmatpush1.msra.mxu0 %v981
        %992 = vmatprep.subr.mxu0 0.0
        %993 = vmatpush1.msra.mxu0 %v980
        %994 = vmatprep.subr.mxu0 0.0
        %995 = vmatpush1.msra.mxu0 %v979
        %996 = vmatprep.subr.mxu0 0.0
        %997 = vmatpush1.msra.mxu0 %v978
        %998 = vmatprep.subr.mxu0 0.0
        %999 = vmatpush1.msra.mxu0 %v977
        %1000 = vmatprep.subr.mxu0 0.0
        %1001 = vmatpush1.msra.mxu0 %v976
        %1002 = vmatprep.subr.mxu0 0.0
        %1003 = vmatpush1.msra.mxu0 %v975
        %1004 = vmatprep.subr.mxu0 0.0
        %1005 = vmatpush1.msra.mxu0 %v974
        %1006 = vmatprep.subr.mxu0 0.0
        %1007 = vmatpush1.msra.mxu0 %v973
        %1008 = vmatprep.subr.mxu0 0.0
        %1009 = vmatpush1.msra.mxu0 %v972
        %1010 = vmatprep.subr.mxu0 0.0
        %1011 = vmatpush1.msra.mxu0 %v971
        %1012 = vmatprep.subr.mxu0 0.0
        %1013 = vmatpush1.msra.mxu0 %v970
        %1014 = vmatprep.subr.mxu0 0.0
        %1015 = vmatpush1.msra.mxu0 %v969
        %1016 = vmatprep.subr.mxu0 0.0
        %1017 = vmatpush1.msra.mxu0 %v968
        %1018 = vmatprep.subr.mxu0 0.0
        %1019 = vmatpush1.msra.mxu0 %v967
        %1020 = vmatprep.subr.mxu0 0.0
        %1021 = vmatpush1.msra.mxu0 %v966
        %1022 = vmatprep.subr.mxu0 0.0
        %1023 = vmatpush2.msra.mxu0 0.0
        %1024 = vmatprep.subr.mxu0 0.0
        %1025 = vmatpush2.msra.mxu0 0.0
        %1026 = vmatprep.subr.mxu0 0.0
        %1027 = vmatpush2.msra.mxu0 0.0
        %1028 = vmatprep.subr.mxu0 0.0
        %1029 = vmatpush2.msra.mxu0 0.0
        %1030 = vmatprep.subr.mxu0 0.0
        %1031 = vmatpush2.msra.mxu0 0.0
        %1032 = vmatprep.subr.mxu0 0.0
        %1033 = vmatpush2.msra.mxu0 0.0
        %1034 = vmatprep.subr.mxu0 0.0
        %1035 = vmatpush2.msra.mxu0 0.0
        %1036 = vmatprep.subr.mxu0 0.0
        %1037 = vmatpush2.msra.mxu0 0.0
        %1038 = vmatprep.subr.mxu0 0.0
        %1039 = vmatpush2.msra.mxu0 0.0
        %1040 = vmatprep.subr.mxu0 0.0
        %1041 = vmatpush2.msra.mxu0 0.0
        %1042 = vmatprep.subr.mxu0 0.0
        %1043 = vmatpush2.msra.mxu0 0.0
        %1044 = vmatprep.subr.mxu0 0.0
        %1045 = vmatpush2.msra.mxu0 0.0
        %1046 = vmatprep.subr.mxu0 0.0
        %1047 = vmatpush2.msra.mxu0 0.0
        %1048 = vmatprep.subr.mxu0 0.0
        %1049 = vmatpush2.msra.mxu0 0.0
        %1050 = vmatprep.subr.mxu0 0.0
        %1051 = vmatpush2.msra.mxu0 0.0
        %1052 = vmatprep.subr.mxu0 0.0
        %1053 = vmatpush2.msra.mxu0 0.0
        %1054 = vmatprep.mubr.f32.mxu0 0.0
        %1055 = vmatmul.mubr.f32.gmra.mxu0 %v949
        %v1056 = vpop.f32.mrf.mxu0
        %v1057 = vadd.f32 %v988, %v1056
        %v1058 = vpop.f32.mrf.mxu0
        %1059 = vmatprep.mubr.f32.mxu0 0.0
        %1060 = vmatmul.mubr.f32.gmra.mxu0 %v950
        %v1061 = vpop.f32.mrf.mxu0
        %v1062 = vadd.f32 %v988, %v1061
        %v1063 = vpop.f32.mrf.mxu0
        %1064 = vmatprep.mubr.f32.mxu0 0.0
        %1065 = vmatmul.mubr.f32.gmra.mxu0 %v951
        %v1066 = vpop.f32.mrf.mxu0
        %v1067 = vadd.f32 %v988, %v1066
        %v1068 = vpop.f32.mrf.mxu0
        %1069 = vmatprep.mubr.f32.mxu0 0.0
        %1070 = vmatmul.mubr.f32.gmra.mxu0 %v952
        %v1071 = vpop.f32.mrf.mxu0
        %v1072 = vadd.f32 %v988, %v1071
        %v1073 = vpop.f32.mrf.mxu0
        %1074 = vmatprep.mubr.f32.mxu0 0.0
        %1075 = vmatmul.mubr.f32.gmra.mxu0 %v953
        %v1076 = vpop.f32.mrf.mxu0
        %v1077 = vadd.f32 %v988, %v1076
        %v1078 = vpop.f32.mrf.mxu0
        %1079 = vmatprep.mubr.f32.mxu0 0.0
        %1080 = vmatmul.mubr.f32.gmra.mxu0 %v954
        %v1081 = vpop.f32.mrf.mxu0
        %v1082 = vadd.f32 %v988, %v1081
        %v1083 = vpop.f32.mrf.mxu0
        %1084 = vmatprep.mubr.f32.mxu0 0.0
        %1085 = vmatmul.mubr.f32.gmra.mxu0 %v955
        %v1086 = vpop.f32.mrf.mxu0
        %v1087 = vadd.f32 %v988, %v1086
        %v1088 = vpop.f32.mrf.mxu0
        %1089 = vmatprep.mubr.f32.mxu0 0.0
        %1090 = vmatmul.mubr.f32.gmra.mxu0 %v956
        %v1091 = vpop.f32.mrf.mxu0
        %v1092 = vadd.f32 %v988, %v1091
        %v1093 = vpop.f32.mrf.mxu0
        %1094 = vmatprep.mubr.f32.mxu0 0.0
        %1095 = vmatmul.mubr.f32.gmra.mxu0 %v957
        %v1096 = vpop.f32.mrf.mxu0
        %v1097 = vadd.f32 %v988, %v1096
        %v1098 = vpop.f32.mrf.mxu0
        %1099 = vmatprep.mubr.f32.mxu0 0.0
        %1100 = vmatmul.mubr.f32.gmra.mxu0 %v958
        %v1101 = vpop.f32.mrf.mxu0
        %v1102 = vadd.f32 %v988, %v1101
        %v1103 = vpop.f32.mrf.mxu0
        %1104 = vmatprep.mubr.f32.mxu0 0.0
        %1105 = vmatmul.mubr.f32.gmra.mxu0 %v959
        %v1106 = vpop.f32.mrf.mxu0
        %v1107 = vadd.f32 %v988, %v1106
        %v1108 = vpop.f32.mrf.mxu0
        %1109 = vmatprep.mubr.f32.mxu0 0.0
        %1110 = vmatmul.mubr.f32.gmra.mxu0 %v960
        %v1111 = vpop.f32.mrf.mxu0
        %v1112 = vadd.f32 %v988, %v1111
        %v1113 = vpop.f32.mrf.mxu0
        %1114 = vmatprep.mubr.f32.mxu0 0.0
        %1115 = vmatmul.mubr.f32.gmra.mxu0 %v961
        %v1116 = vpop.f32.mrf.mxu0
        %v1117 = vadd.f32 %v988, %v1116
        %v1118 = vpop.f32.mrf.mxu0
        %1119 = vmatprep.mubr.f32.mxu0 0.0
        %1120 = vmatmul.mubr.f32.gmra.mxu0 %v962
        %v1121 = vpop.f32.mrf.mxu0
        %v1122 = vadd.f32 %v988, %v1121
        %v1123 = vpop.f32.mrf.mxu0
        %1124 = vmatprep.mubr.f32.mxu0 0.0
        %1125 = vmatmul.mubr.f32.gmra.mxu0 %v963
        %v1126 = vpop.f32.mrf.mxu0
        %v1127 = vadd.f32 %v988, %v1126
        %v1128 = vpop.f32.mrf.mxu0
        %1129 = vmatprep.mubr.f32.mxu0 0.0
        %1130 = vmatmul.mubr.f32.gmra.mxu0 %v964
        %v1131 = vpop.f32.mrf.mxu0
        %v1132 = vadd.f32 %v988, %v1131
        %v1133 = vpop.f32.mrf.mxu0
        %1134 = vdwg.mxu0
        %v1135 = vmax.f32 %v1057, 0.0
        %v1136 = vmax.f32 %v1062, 0.0
        %v1137 = vmax.f32 %v1067, 0.0
        %v1138 = vmax.f32 %v1072, 0.0
        %v1139 = vmax.f32 %v1077, 0.0
        %v1140 = vmax.f32 %v1082, 0.0
        %v1141 = vmax.f32 %v1087, 0.0
        %v1142 = vmax.f32 %v1092, 0.0
        %v1143 = vmax.f32 %v1097, 0.0
        %v1144 = vmax.f32 %v1102, 0.0
        %v1145 = vmax.f32 %v1107, 0.0
        %v1146 = vmax.f32 %v1112, 0.0
        %v1147 = vmax.f32 %v1117, 0.0
        %v1148 = vmax.f32 %v1122, 0.0
        %v1149 = vmax.f32 %v1127, 0.0
        %v1150 = vmax.f32 %v1132, 0.0
        %s1151 = scalar_lea.vmem %s4, 256
        %v1152 = vld [vmem:[%s1151] sm:$0xff]
        %v1153 = vld [vmem:[%s1151 + $0x8] sm:$0xff]
        %v1154 = vld [vmem:[%s1151 + $0x10] sm:$0xff]
        %v1155 = vld [vmem:[%s1151 + $0x18] sm:$0xff]
        %v1156 = vld [vmem:[%s1151 + $0x20] sm:$0xff]
        %v1157 = vld [vmem:[%s1151 + $0x28] sm:$0xff]
        %v1158 = vld [vmem:[%s1151 + $0x30] sm:$0xff]
        %v1159 = vld [vmem:[%s1151 + $0x38] sm:$0xff]
        %v1160 = vld [vmem:[%s1151 + $0x40] sm:$0xff]
        %v1161 = vld [vmem:[%s1151 + $0x48] sm:$0xff]
        %v1162 = vld [vmem:[%s1151 + $0x50] sm:$0xff]
        %v1163 = vld [vmem:[%s1151 + $0x58] sm:$0xff]
        %v1164 = vld [vmem:[%s1151 + $0x60] sm:$0xff]
        %v1165 = vld [vmem:[%s1151 + $0x68] sm:$0xff]
        %v1166 = vld [vmem:[%s1151 + $0x70] sm:$0xff]
        %v1167 = vld [vmem:[%s1151 + $0x78] sm:$0xff]
        %s1168 = scalar_lea.vmem %s5, 2
        %v1169 = vld [vmem:[%s1168] sm:$0x1]
        %v1171 = vlaneseq
        %v1172 = vshrl.u32 %v1171, 7
        %v1173 = vsub.s32 0, %v1172
        %v1174 = vrot.slane %v1169, %v1173
        %1176 = vmatprep.subr.mxu0 0.0
        %1177 = vmatpush1.msra.mxu0 %v1167
        %1178 = vmatprep.subr.mxu0 0.0
        %1179 = vmatpush1.msra.mxu0 %v1166
        %1180 = vmatprep.subr.mxu0 0.0
        %1181 = vmatpush1.msra.mxu0 %v1165
        %1182 = vmatprep.subr.mxu0 0.0
        %1183 = vmatpush1.msra.mxu0 %v1164
        %1184 = vmatprep.subr.mxu0 0.0
        %1185 = vmatpush1.msra.mxu0 %v1163
        %1186 = vmatprep.subr.mxu0 0.0
        %1187 = vmatpush1.msra.mxu0 %v1162
        %1188 = vmatprep.subr.mxu0 0.0
        %1189 = vmatpush1.msra.mxu0 %v1161
        %1190 = vmatprep.subr.mxu0 0.0
        %1191 = vmatpush1.msra.mxu0 %v1160
        %1192 = vmatprep.subr.mxu0 0.0
        %1193 = vmatpush1.msra.mxu0 %v1159
        %1194 = vmatprep.subr.mxu0 0.0
        %1195 = vmatpush1.msra.mxu0 %v1158
        %1196 = vmatprep.subr.mxu0 0.0
        %1197 = vmatpush1.msra.mxu0 %v1157
        %1198 = vmatprep.subr.mxu0 0.0
        %1199 = vmatpush1.msra.mxu0 %v1156
        %1200 = vmatprep.subr.mxu0 0.0
        %1201 = vmatpush1.msra.mxu0 %v1155
        %1202 = vmatprep.subr.mxu0 0.0
        %1203 = vmatpush1.msra.mxu0 %v1154
        %1204 = vmatprep.subr.mxu0 0.0
        %1205 = vmatpush1.msra.mxu0 %v1153
        %1206 = vmatprep.subr.mxu0 0.0
        %1207 = vmatpush1.msra.mxu0 %v1152
        %1208 = vmatprep.subr.mxu0 0.0
        %1209 = vmatpush2.msra.mxu0 0.0
        %1210 = vmatprep.subr.mxu0 0.0
        %1211 = vmatpush2.msra.mxu0 0.0
        %1212 = vmatprep.subr.mxu0 0.0
        %1213 = vmatpush2.msra.mxu0 0.0
        %1214 = vmatprep.subr.mxu0 0.0
        %1215 = vmatpush2.msra.mxu0 0.0
        %1216 = vmatprep.subr.mxu0 0.0
        %1217 = vmatpush2.msra.mxu0 0.0
        %1218 = vmatprep.subr.mxu0 0.0
        %1219 = vmatpush2.msra.mxu0 0.0
        %1220 = vmatprep.subr.mxu0 0.0
        %1221 = vmatpush2.msra.mxu0 0.0
        %1222 = vmatprep.subr.mxu0 0.0
        %1223 = vmatpush2.msra.mxu0 0.0
        %1224 = vmatprep.subr.mxu0 0.0
        %1225 = vmatpush2.msra.mxu0 0.0
        %1226 = vmatprep.subr.mxu0 0.0
        %1227 = vmatpush2.msra.mxu0 0.0
        %1228 = vmatprep.subr.mxu0 0.0
        %1229 = vmatpush2.msra.mxu0 0.0
        %1230 = vmatprep.subr.mxu0 0.0
        %1231 = vmatpush2.msra.mxu0 0.0
        %1232 = vmatprep.subr.mxu0 0.0
        %1233 = vmatpush2.msra.mxu0 0.0
        %1234 = vmatprep.subr.mxu0 0.0
        %1235 = vmatpush2.msra.mxu0 0.0
        %1236 = vmatprep.subr.mxu0 0.0
        %1237 = vmatpush2.msra.mxu0 0.0
        %1238 = vmatprep.subr.mxu0 0.0
        %1239 = vmatpush2.msra.mxu0 0.0
        %1240 = vmatprep.mubr.f32.mxu0 0.0
        %1241 = vmatmul.mubr.f32.gmra.mxu0 %v1135
        %v1242 = vpop.f32.mrf.mxu0
        %v1243 = vadd.f32 %v1174, %v1242
        %v1244 = vpop.f32.mrf.mxu0
        %1245 = vmatprep.mubr.f32.mxu0 0.0
        %1246 = vmatmul.mubr.f32.gmra.mxu0 %v1136
        %v1247 = vpop.f32.mrf.mxu0
        %v1248 = vadd.f32 %v1174, %v1247
        %v1249 = vpop.f32.mrf.mxu0
        %1250 = vmatprep.mubr.f32.mxu0 0.0
        %1251 = vmatmul.mubr.f32.gmra.mxu0 %v1137
        %v1252 = vpop.f32.mrf.mxu0
        %v1253 = vadd.f32 %v1174, %v1252
        %v1254 = vpop.f32.mrf.mxu0
        %1255 = vmatprep.mubr.f32.mxu0 0.0
        %1256 = vmatmul.mubr.f32.gmra.mxu0 %v1138
        %v1257 = vpop.f32.mrf.mxu0
        %v1258 = vadd.f32 %v1174, %v1257
        %v1259 = vpop.f32.mrf.mxu0
        %1260 = vmatprep.mubr.f32.mxu0 0.0
        %1261 = vmatmul.mubr.f32.gmra.mxu0 %v1139
        %v1262 = vpop.f32.mrf.mxu0
        %v1263 = vadd.f32 %v1174, %v1262
        %v1264 = vpop.f32.mrf.mxu0
        %1265 = vmatprep.mubr.f32.mxu0 0.0
        %1266 = vmatmul.mubr.f32.gmra.mxu0 %v1140
        %v1267 = vpop.f32.mrf.mxu0
        %v1268 = vadd.f32 %v1174, %v1267
        %v1269 = vpop.f32.mrf.mxu0
        %1270 = vmatprep.mubr.f32.mxu0 0.0
        %1271 = vmatmul.mubr.f32.gmra.mxu0 %v1141
        %v1272 = vpop.f32.mrf.mxu0
        %v1273 = vadd.f32 %v1174, %v1272
        %v1274 = vpop.f32.mrf.mxu0
        %1275 = vmatprep.mubr.f32.mxu0 0.0
        %1276 = vmatmul.mubr.f32.gmra.mxu0 %v1142
        %v1277 = vpop.f32.mrf.mxu0
        %v1278 = vadd.f32 %v1174, %v1277
        %v1279 = vpop.f32.mrf.mxu0
        %1280 = vmatprep.mubr.f32.mxu0 0.0
        %1281 = vmatmul.mubr.f32.gmra.mxu0 %v1143
        %v1282 = vpop.f32.mrf.mxu0
        %v1283 = vadd.f32 %v1174, %v1282
        %v1284 = vpop.f32.mrf.mxu0
        %1285 = vmatprep.mubr.f32.mxu0 0.0
        %1286 = vmatmul.mubr.f32.gmra.mxu0 %v1144
        %v1287 = vpop.f32.mrf.mxu0
        %v1288 = vadd.f32 %v1174, %v1287
        %v1289 = vpop.f32.mrf.mxu0
        %1290 = vmatprep.mubr.f32.mxu0 0.0
        %1291 = vmatmul.mubr.f32.gmra.mxu0 %v1145
        %v1292 = vpop.f32.mrf.mxu0
        %v1293 = vadd.f32 %v1174, %v1292
        %v1294 = vpop.f32.mrf.mxu0
        %1295 = vmatprep.mubr.f32.mxu0 0.0
        %1296 = vmatmul.mubr.f32.gmra.mxu0 %v1146
        %v1297 = vpop.f32.mrf.mxu0
        %v1298 = vadd.f32 %v1174, %v1297
        %v1299 = vpop.f32.mrf.mxu0
        %1300 = vmatprep.mubr.f32.mxu0 0.0
        %1301 = vmatmul.mubr.f32.gmra.mxu0 %v1147
        %v1302 = vpop.f32.mrf.mxu0
        %v1303 = vadd.f32 %v1174, %v1302
        %v1304 = vpop.f32.mrf.mxu0
        %1305 = vmatprep.mubr.f32.mxu0 0.0
        %1306 = vmatmul.mubr.f32.gmra.mxu0 %v1148
        %v1307 = vpop.f32.mrf.mxu0
        %v1308 = vadd.f32 %v1174, %v1307
        %v1309 = vpop.f32.mrf.mxu0
        %1310 = vmatprep.mubr.f32.mxu0 0.0
        %1311 = vmatmul.mubr.f32.gmra.mxu0 %v1149
        %v1312 = vpop.f32.mrf.mxu0
        %v1313 = vadd.f32 %v1174, %v1312
        %v1314 = vpop.f32.mrf.mxu0
        %1315 = vmatprep.mubr.f32.mxu0 0.0
        %1316 = vmatmul.mubr.f32.gmra.mxu0 %v1150
        %v1317 = vpop.f32.mrf.mxu0
        %v1318 = vadd.f32 %v1174, %v1317
        %v1319 = vpop.f32.mrf.mxu0
        %1320 = vdwg.mxu0
        %v1321 = vmax.f32 %v1243, 0.0
        %v1322 = vmax.f32 %v1248, 0.0
        %v1323 = vmax.f32 %v1253, 0.0
        %v1324 = vmax.f32 %v1258, 0.0
        %v1325 = vmax.f32 %v1263, 0.0
        %v1326 = vmax.f32 %v1268, 0.0
        %v1327 = vmax.f32 %v1273, 0.0
        %v1328 = vmax.f32 %v1278, 0.0
        %v1329 = vmax.f32 %v1283, 0.0
        %v1330 = vmax.f32 %v1288, 0.0
        %v1331 = vmax.f32 %v1293, 0.0
        %v1332 = vmax.f32 %v1298, 0.0
        %v1333 = vmax.f32 %v1303, 0.0
        %v1334 = vmax.f32 %v1308, 0.0
        %v1335 = vmax.f32 %v1313, 0.0
        %v1336 = vmax.f32 %v1318, 0.0
        %v1337 = vld [vmem:[%s6] sm:$0x1]
        %v1339 = vlaneseq
        %v1340 = vshrl.u32 %v1339, 7
        %v1341 = vsub.s32 0, %v1340
        %v1342 = vrot.slane %v1337, %v1341
        %v1344 = vmul.f32 %v1321, %v1342
        %v1345 = vmul.f32 %v1322, %v1342
        %v1346 = vmul.f32 %v1323, %v1342
        %v1347 = vmul.f32 %v1324, %v1342
        %v1348 = vmul.f32 %v1325, %v1342
        %v1349 = vmul.f32 %v1326, %v1342
        %v1350 = vmul.f32 %v1327, %v1342
        %v1351 = vmul.f32 %v1328, %v1342
        %v1352 = vmul.f32 %v1329, %v1342
        %v1353 = vmul.f32 %v1330, %v1342
        %v1354 = vmul.f32 %v1331, %v1342
        %v1355 = vmul.f32 %v1332, %v1342
        %v1356 = vmul.f32 %v1333, %v1342
        %v1357 = vmul.f32 %v1334, %v1342
        %v1358 = vmul.f32 %v1335, %v1342
        %v1359 = vmul.f32 %v1336, %v1342
        %v1360 = vld [vmem:[%s7] sm:$0x1]
        %v1362 = vlaneseq
        %v1363 = vshrl.u32 %v1362, 7
        %v1364 = vsub.s32 0, %v1363
        %v1365 = vrot.slane %v1360, %v1364
        %v1367 = vadd.f32 %v1344, %v1365
        %v1368 = vadd.f32 %v1345, %v1365
        %v1369 = vadd.f32 %v1346, %v1365
        %v1370 = vadd.f32 %v1347, %v1365
        %v1371 = vadd.f32 %v1348, %v1365
        %v1372 = vadd.f32 %v1349, %v1365
        %v1373 = vadd.f32 %v1350, %v1365
        %v1374 = vadd.f32 %v1351, %v1365
        %v1375 = vadd.f32 %v1352, %v1365
        %v1376 = vadd.f32 %v1353, %v1365
        %v1377 = vadd.f32 %v1354, %v1365
        %v1378 = vadd.f32 %v1355, %v1365
        %v1379 = vadd.f32 %v1356, %v1365
        %v1380 = vadd.f32 %v1357, %v1365
        %v1381 = vadd.f32 %v1358, %v1365
        %v1382 = vadd.f32 %v1359, %v1365
        %v1383 = vlaneseq
        %v1384 = vshrl.u32 %v1383, 7
        %v1385 = vld [vmem:[%s541] sm:$0x1]
        %v1386 = vlaneseq
        %v1387 = vshrl.u32 %v1386, 7
        %v1388 = vsub.s32 0, %v1387
        %v1389 = vrot.slane %v1385, %v1388
        %vm1390 = vcmp.eq.s32.totalorder %v1384, %v1389
        %v1391 = vsel %vm1390, 1, 0
        %v1392 = vcvt.s32.f32 %v1391
        %v1393 = vld [vmem:[#allocation2] sm:$0xff]
        %1394 = vmatprep.subr.mxu0 0.0
        %1395 = vmatpush1.msra.mxu0 %v1382
        %1396 = vmatprep.subr.mxu0 0.0
        %1397 = vmatpush1.msra.mxu0 %v1381
        %1398 = vmatprep.subr.mxu0 0.0
        %1399 = vmatpush1.msra.mxu0 %v1380
        %1400 = vmatprep.subr.mxu0 0.0
        %1401 = vmatpush1.msra.mxu0 %v1379
        %1402 = vmatprep.subr.mxu0 0.0
        %1403 = vmatpush1.msra.mxu0 %v1378
        %1404 = vmatprep.subr.mxu0 0.0
        %1405 = vmatpush1.msra.mxu0 %v1377
        %1406 = vmatprep.subr.mxu0 0.0
        %1407 = vmatpush1.msra.mxu0 %v1376
        %1408 = vmatprep.subr.mxu0 0.0
        %1409 = vmatpush1.msra.mxu0 %v1375
        %1410 = vmatprep.subr.mxu0 0.0
        %1411 = vmatpush1.msra.mxu0 %v1374
        %1412 = vmatprep.subr.mxu0 0.0
        %1413 = vmatpush1.msra.mxu0 %v1373
        %1414 = vmatprep.subr.mxu0 0.0
        %1415 = vmatpush1.msra.mxu0 %v1372
        %1416 = vmatprep.subr.mxu0 0.0
        %1417 = vmatpush1.msra.mxu0 %v1371
        %1418 = vmatprep.subr.mxu0 0.0
        %1419 = vmatpush1.msra.mxu0 %v1370
        %1420 = vmatprep.subr.mxu0 0.0
        %1421 = vmatpush1.msra.mxu0 %v1369
        %1422 = vmatprep.subr.mxu0 0.0
        %1423 = vmatpush1.msra.mxu0 %v1368
        %1424 = vmatprep.subr.mxu0 0.0
        %1425 = vmatpush1.msra.mxu0 %v1367
        %1426 = vmatprep.subr.mxu0 0.0
        %1427 = vmatpush2.msra.mxu0 0.0
        %1428 = vmatprep.subr.mxu0 0.0
        %1429 = vmatpush2.msra.mxu0 0.0
        %1430 = vmatprep.subr.mxu0 0.0
        %1431 = vmatpush2.msra.mxu0 0.0
        %1432 = vmatprep.subr.mxu0 0.0
        %1433 = vmatpush2.msra.mxu0 0.0
        %1434 = vmatprep.subr.mxu0 0.0
        %1435 = vmatpush2.msra.mxu0 0.0
        %1436 = vmatprep.subr.mxu0 0.0
        %1437 = vmatpush2.msra.mxu0 0.0
        %1438 = vmatprep.subr.mxu0 0.0
        %1439 = vmatpush2.msra.mxu0 0.0
        %1440 = vmatprep.subr.mxu0 0.0
        %1441 = vmatpush2.msra.mxu0 0.0
        %1442 = vmatprep.subr.mxu0 0.0
        %1443 = vmatpush2.msra.mxu0 0.0
        %1444 = vmatprep.subr.mxu0 0.0
        %1445 = vmatpush2.msra.mxu0 0.0
        %1446 = vmatprep.subr.mxu0 0.0
        %1447 = vmatpush2.msra.mxu0 0.0
        %1448 = vmatprep.subr.mxu0 0.0
        %1449 = vmatpush2.msra.mxu0 0.0
        %1450 = vmatprep.subr.mxu0 0.0
        %1451 = vmatpush2.msra.mxu0 0.0
        %1452 = vmatprep.subr.mxu0 0.0
        %1453 = vmatpush2.msra.mxu0 0.0
        %1454 = vmatprep.subr.mxu0 0.0
        %1455 = vmatpush2.msra.mxu0 0.0
        %1456 = vmatprep.subr.mxu0 0.0
        %1457 = vmatpush2.msra.mxu0 0.0
        %1458 = vmatprep.mubr.f32.mxu0 0.0
        %1459 = vmatmul.mubr.f32.gmra.mxu0 %v1392
        %v1460 = vpop.f32.mrf.mxu0
        %v1461 = vadd.f32 0.0, %v1460
        %v1462 = vpop.f32.mrf.mxu0
        %1463 = vdwg.mxu0
        %v1464 = vadd.f32 %v1393, %v1461
        %1465 = vst [vmem:[#allocation2] sm:$0xff] %v1464
        %p1466 = scmp.eq.s32.totalorder %s30, 2
        // Predicated region
        $region97: #{tpu_custom_call.1} parent=79 // pred_check
          %p1467 = pneg %p1466
        $region98: #{tpu_custom_call.1} parent=79 // pred_check_branch
          %1469 = sbr.rel (%p1467) target = $region100
        $region99: #{tpu_custom_call.1} parent=79 // pred_region
          %s1470 = sld [smem:[#allocation3]]
          %v1471 = vld [vmem:[#allocation2] sm:$0xff]
          %v1472 = vld [vmem:[#allocation4] sm:$0xff]
          %v1473 = vld [vmem:[#allocation4 + $0x8] sm:$0xff]
          %v1474 = vld [vmem:[#allocation4 + $0x10] sm:$0xff]
          %v1475 = vld [vmem:[#allocation4 + $0x18] sm:$0xff]
          %v1476 = vld [vmem:[#allocation4 + $0x20] sm:$0xff]
          %v1477 = vld [vmem:[#allocation4 + $0x28] sm:$0xff]
          %v1478 = vld [vmem:[#allocation4 + $0x30] sm:$0xff]
          %v1479 = vld [vmem:[#allocation4 + $0x38] sm:$0xff]
          %v1480 = vld [vmem:[#allocation4 + $0x40] sm:$0xff]
          %v1481 = vld [vmem:[#allocation4 + $0x48] sm:$0xff]
          %v1482 = vld [vmem:[#allocation4 + $0x50] sm:$0xff]
          %v1483 = vld [vmem:[#allocation4 + $0x58] sm:$0xff]
          %v1484 = vld [vmem:[#allocation4 + $0x60] sm:$0xff]
          %v1485 = vld [vmem:[#allocation4 + $0x68] sm:$0xff]
          %v1486 = vld [vmem:[#allocation4 + $0x70] sm:$0xff]
          %v1487 = vld [vmem:[#allocation4 + $0x78] sm:$0xff]
          %v1488 = vld [vmem:[%s9] sm:$0x1]
          %v1490 = vlaneseq
          %v1491 = vshrl.u32 %v1490, 7
          %v1492 = vsub.s32 0, %v1491
          %v1493 = vrot.slane %v1488, %v1492
          %1495 = vmatprep.subr.mxu0 0.0
          %1496 = vmatpush1.msra.mxu0 %v1487
          %1497 = vmatprep.subr.mxu0 0.0
          %1498 = vmatpush1.msra.mxu0 %v1486
          %1499 = vmatprep.subr.mxu0 0.0
          %1500 = vmatpush1.msra.mxu0 %v1485
          %1501 = vmatprep.subr.mxu0 0.0
          %1502 = vmatpush1.msra.mxu0 %v1484
          %1503 = vmatprep.subr.mxu0 0.0
          %1504 = vmatpush1.msra.mxu0 %v1483
          %1505 = vmatprep.subr.mxu0 0.0
          %1506 = vmatpush1.msra.mxu0 %v1482
          %1507 = vmatprep.subr.mxu0 0.0
          %1508 = vmatpush1.msra.mxu0 %v1481
          %1509 = vmatprep.subr.mxu0 0.0
          %1510 = vmatpush1.msra.mxu0 %v1480
          %1511 = vmatprep.subr.mxu0 0.0
          %1512 = vmatpush1.msra.mxu0 %v1479
          %1513 = vmatprep.subr.mxu0 0.0
          %1514 = vmatpush1.msra.mxu0 %v1478
          %1515 = vmatprep.subr.mxu0 0.0
          %1516 = vmatpush1.msra.mxu0 %v1477
          %1517 = vmatprep.subr.mxu0 0.0
          %1518 = vmatpush1.msra.mxu0 %v1476
          %1519 = vmatprep.subr.mxu0 0.0
          %1520 = vmatpush1.msra.mxu0 %v1475
          %1521 = vmatprep.subr.mxu0 0.0
          %1522 = vmatpush1.msra.mxu0 %v1474
          %1523 = vmatprep.subr.mxu0 0.0
          %1524 = vmatpush1.msra.mxu0 %v1473
          %1525 = vmatprep.subr.mxu0 0.0
          %1526 = vmatpush1.msra.mxu0 %v1472
          %1527 = vmatprep.subr.mxu0 0.0
          %1528 = vmatpush2.msra.mxu0 0.0
          %1529 = vmatprep.subr.mxu0 0.0
          %1530 = vmatpush2.msra.mxu0 0.0
          %1531 = vmatprep.subr.mxu0 0.0
          %1532 = vmatpush2.msra.mxu0 0.0
          %1533 = vmatprep.subr.mxu0 0.0
          %1534 = vmatpush2.msra.mxu0 0.0
          %1535 = vmatprep.subr.mxu0 0.0
          %1536 = vmatpush2.msra.mxu0 0.0
          %1537 = vmatprep.subr.mxu0 0.0
          %1538 = vmatpush2.msra.mxu0 0.0
          %1539 = vmatprep.subr.mxu0 0.0
          %1540 = vmatpush2.msra.mxu0 0.0
          %1541 = vmatprep.subr.mxu0 0.0
          %1542 = vmatpush2.msra.mxu0 0.0
          %1543 = vmatprep.subr.mxu0 0.0
          %1544 = vmatpush2.msra.mxu0 0.0
          %1545 = vmatprep.subr.mxu0 0.0
          %1546 = vmatpush2.msra.mxu0 0.0
          %1547 = vmatprep.subr.mxu0 0.0
          %1548 = vmatpush2.msra.mxu0 0.0
          %1549 = vmatprep.subr.mxu0 0.0
          %1550 = vmatpush2.msra.mxu0 0.0
          %1551 = vmatprep.subr.mxu0 0.0
          %1552 = vmatpush2.msra.mxu0 0.0
          %1553 = vmatprep.subr.mxu0 0.0
          %1554 = vmatpush2.msra.mxu0 0.0
          %1555 = vmatprep.subr.mxu0 0.0
          %1556 = vmatpush2.msra.mxu0 0.0
          %1557 = vmatprep.subr.mxu0 0.0
          %1558 = vmatpush2.msra.mxu0 0.0
          %1559 = vmatprep.mubr.f32.mxu0 0.0
          %1560 = vmatmul.mubr.f32.gmra.mxu0 %v1471
          %v1561 = vpop.f32.mrf.mxu0
          %v1562 = vadd.f32 %v1493, %v1561
          %v1563 = vpop.f32.mrf.mxu0
          %1564 = vdwg.mxu0
          %vm1565 = vcmp.ge.f32.partialorder %v1562, 0.0
          %v1566 = vstv %s1470
          %v1567 = vmul.f32 %v1566, %v1562
          %v1568 = vsel %vm1565, %v1562, %v1567
          %v1569 = vld [vmem:[#allocation7] sm:$0xff]
          %v1570 = vld [vmem:[#allocation7 + $0x8] sm:$0xff]
          %v1571 = vld [vmem:[#allocation7 + $0x10] sm:$0xff]
          %v1572 = vld [vmem:[#allocation7 + $0x18] sm:$0xff]
          %v1573 = vld [vmem:[#allocation7 + $0x20] sm:$0xff]
          %v1574 = vld [vmem:[#allocation7 + $0x28] sm:$0xff]
          %v1575 = vld [vmem:[#allocation7 + $0x30] sm:$0xff]
          %v1576 = vld [vmem:[#allocation7 + $0x38] sm:$0xff]
          %v1577 = vld [vmem:[#allocation7 + $0x40] sm:$0xff]
          %v1578 = vld [vmem:[#allocation7 + $0x48] sm:$0xff]
          %v1579 = vld [vmem:[#allocation7 + $0x50] sm:$0xff]
          %v1580 = vld [vmem:[#allocation7 + $0x58] sm:$0xff]
          %v1581 = vld [vmem:[#allocation7 + $0x60] sm:$0xff]
          %v1582 = vld [vmem:[#allocation7 + $0x68] sm:$0xff]
          %v1583 = vld [vmem:[#allocation7 + $0x70] sm:$0xff]
          %v1584 = vld [vmem:[#allocation7 + $0x78] sm:$0xff]
          %v1585 = vld [vmem:[%s11] sm:$0x1]
          %v1587 = vlaneseq
          %v1588 = vshrl.u32 %v1587, 7
          %v1589 = vsub.s32 0, %v1588
          %v1590 = vrot.slane %v1585, %v1589
          %1592 = vmatprep.subr.mxu0 0.0
          %1593 = vmatpush1.msra.mxu0 %v1584
          %1594 = vmatprep.subr.mxu0 0.0
          %1595 = vmatpush1.msra.mxu0 %v1583
          %1596 = vmatprep.subr.mxu0 0.0
          %1597 = vmatpush1.msra.mxu0 %v1582
          %1598 = vmatprep.subr.mxu0 0.0
          %1599 = vmatpush1.msra.mxu0 %v1581
          %1600 = vmatprep.subr.mxu0 0.0
          %1601 = vmatpush1.msra.mxu0 %v1580
          %1602 = vmatprep.subr.mxu0 0.0
          %1603 = vmatpush1.msra.mxu0 %v1579
          %1604 = vmatprep.subr.mxu0 0.0
          %1605 = vmatpush1.msra.mxu0 %v1578
          %1606 = vmatprep.subr.mxu0 0.0
          %1607 = vmatpush1.msra.mxu0 %v1577
          %1608 = vmatprep.subr.mxu0 0.0
          %1609 = vmatpush1.msra.mxu0 %v1576
          %1610 = vmatprep.subr.mxu0 0.0
          %1611 = vmatpush1.msra.mxu0 %v1575
          %1612 = vmatprep.subr.mxu0 0.0
          %1613 = vmatpush1.msra.mxu0 %v1574
          %1614 = vmatprep.subr.mxu0 0.0
          %1615 = vmatpush1.msra.mxu0 %v1573
          %1616 = vmatprep.subr.mxu0 0.0
          %1617 = vmatpush1.msra.mxu0 %v1572
          %1618 = vmatprep.subr.mxu0 0.0
          %1619 = vmatpush1.msra.mxu0 %v1571
          %1620 = vmatprep.subr.mxu0 0.0
          %1621 = vmatpush1.msra.mxu0 %v1570
          %1622 = vmatprep.subr.mxu0 0.0
          %1623 = vmatpush1.msra.mxu0 %v1569
          %1624 = vmatprep.subr.mxu0 0.0
          %1625 = vmatpush2.msra.mxu0 0.0
          %1626 = vmatprep.subr.mxu0 0.0
          %1627 = vmatpush2.msra.mxu0 0.0
          %1628 = vmatprep.subr.mxu0 0.0
          %1629 = vmatpush2.msra.mxu0 0.0
          %1630 = vmatprep.subr.mxu0 0.0
          %1631 = vmatpush2.msra.mxu0 0.0
          %1632 = vmatprep.subr.mxu0 0.0
          %1633 = vmatpush2.msra.mxu0 0.0
          %1634 = vmatprep.subr.mxu0 0.0
          %1635 = vmatpush2.msra.mxu0 0.0
          %1636 = vmatprep.subr.mxu0 0.0
          %1637 = vmatpush2.msra.mxu0 0.0
          %1638 = vmatprep.subr.mxu0 0.0
          %1639 = vmatpush2.msra.mxu0 0.0
          %1640 = vmatprep.subr.mxu0 0.0
          %1641 = vmatpush2.msra.mxu0 0.0
          %1642 = vmatprep.subr.mxu0 0.0
          %1643 = vmatpush2.msra.mxu0 0.0
          %1644 = vmatprep.subr.mxu0 0.0
          %1645 = vmatpush2.msra.mxu0 0.0
          %1646 = vmatprep.subr.mxu0 0.0
          %1647 = vmatpush2.msra.mxu0 0.0
          %1648 = vmatprep.subr.mxu0 0.0
          %1649 = vmatpush2.msra.mxu0 0.0
          %1650 = vmatprep.subr.mxu0 0.0
          %1651 = vmatpush2.msra.mxu0 0.0
          %1652 = vmatprep.subr.mxu0 0.0
          %1653 = vmatpush2.msra.mxu0 0.0
          %1654 = vmatprep.subr.mxu0 0.0
          %1655 = vmatpush2.msra.mxu0 0.0
          %1656 = vmatprep.mubr.f32.mxu0 0.0
          %1657 = vmatmul.mubr.f32.gmra.mxu0 %v1568
          %v1658 = vpop.f32.mrf.mxu0
          %v1659 = vadd.f32 %v1590, %v1658
          %v1660 = vpop.f32.mrf.mxu0
          %1661 = vdwg.mxu0
          %v1662 = vxor.u32 %v1659, 2147483648
          %v1663 = vmul.f32 %v1662, 1.442695
          %v1664 = vpow.pop %v1663
          %v1665 = vadd.f32 %v1664, 1.0
          %v1666 = vrcp.pop %v1665
          %v1667 = vmul.f32 1.0, %v1666
          %v1668 = vld [vmem:[#allocation9] sm:$0xff]
          %v1669 = vld [vmem:[#allocation9 + $0x8] sm:$0xff]
          %v1670 = vld [vmem:[#allocation9 + $0x10] sm:$0xff]
          %v1671 = vld [vmem:[#allocation9 + $0x18] sm:$0xff]
          %v1672 = vld [vmem:[#allocation9 + $0x20] sm:$0xff]
          %v1673 = vld [vmem:[#allocation9 + $0x28] sm:$0xff]
          %v1674 = vld [vmem:[#allocation9 + $0x30] sm:$0xff]
          %v1675 = vld [vmem:[#allocation9 + $0x38] sm:$0xff]
          %v1676 = vld [vmem:[#allocation9 + $0x40] sm:$0xff]
          %v1677 = vld [vmem:[#allocation9 + $0x48] sm:$0xff]
          %v1678 = vld [vmem:[#allocation9 + $0x50] sm:$0xff]
          %v1679 = vld [vmem:[#allocation9 + $0x58] sm:$0xff]
          %v1680 = vld [vmem:[#allocation9 + $0x60] sm:$0xff]
          %v1681 = vld [vmem:[#allocation9 + $0x68] sm:$0xff]
          %v1682 = vld [vmem:[#allocation9 + $0x70] sm:$0xff]
          %v1683 = vld [vmem:[#allocation9 + $0x78] sm:$0xff]
          %v1684 = vld [vmem:[%s13] sm:$0x1]
          %v1686 = vlaneseq
          %v1687 = vshrl.u32 %v1686, 7
          %v1688 = vsub.s32 0, %v1687
          %v1689 = vrot.slane %v1684, %v1688
          %1691 = vmatprep.subr.mxu0 0.0
          %1692 = vmatpush1.msra.mxu0 %v1683
          %1693 = vmatprep.subr.mxu0 0.0
          %1694 = vmatpush1.msra.mxu0 %v1682
          %1695 = vmatprep.subr.mxu0 0.0
          %1696 = vmatpush1.msra.mxu0 %v1681
          %1697 = vmatprep.subr.mxu0 0.0
          %1698 = vmatpush1.msra.mxu0 %v1680
          %1699 = vmatprep.subr.mxu0 0.0
          %1700 = vmatpush1.msra.mxu0 %v1679
          %1701 = vmatprep.subr.mxu0 0.0
          %1702 = vmatpush1.msra.mxu0 %v1678
          %1703 = vmatprep.subr.mxu0 0.0
          %1704 = vmatpush1.msra.mxu0 %v1677
          %1705 = vmatprep.subr.mxu0 0.0
          %1706 = vmatpush1.msra.mxu0 %v1676
          %1707 = vmatprep.subr.mxu0 0.0
          %1708 = vmatpush1.msra.mxu0 %v1675
          %1709 = vmatprep.subr.mxu0 0.0
          %1710 = vmatpush1.msra.mxu0 %v1674
          %1711 = vmatprep.subr.mxu0 0.0
          %1712 = vmatpush1.msra.mxu0 %v1673
          %1713 = vmatprep.subr.mxu0 0.0
          %1714 = vmatpush1.msra.mxu0 %v1672
          %1715 = vmatprep.subr.mxu0 0.0
          %1716 = vmatpush1.msra.mxu0 %v1671
          %1717 = vmatprep.subr.mxu0 0.0
          %1718 = vmatpush1.msra.mxu0 %v1670
          %1719 = vmatprep.subr.mxu0 0.0
          %1720 = vmatpush1.msra.mxu0 %v1669
          %1721 = vmatprep.subr.mxu0 0.0
          %1722 = vmatpush1.msra.mxu0 %v1668
          %1723 = vmatprep.subr.mxu0 0.0
          %1724 = vmatpush2.msra.mxu0 0.0
          %1725 = vmatprep.subr.mxu0 0.0
          %1726 = vmatpush2.msra.mxu0 0.0
          %1727 = vmatprep.subr.mxu0 0.0
          %1728 = vmatpush2.msra.mxu0 0.0
          %1729 = vmatprep.subr.mxu0 0.0
          %1730 = vmatpush2.msra.mxu0 0.0
          %1731 = vmatprep.subr.mxu0 0.0
          %1732 = vmatpush2.msra.mxu0 0.0
          %1733 = vmatprep.subr.mxu0 0.0
          %1734 = vmatpush2.msra.mxu0 0.0
          %1735 = vmatprep.subr.mxu0 0.0
          %1736 = vmatpush2.msra.mxu0 0.0
          %1737 = vmatprep.subr.mxu0 0.0
          %1738 = vmatpush2.msra.mxu0 0.0
          %1739 = vmatprep.subr.mxu0 0.0
          %1740 = vmatpush2.msra.mxu0 0.0
          %1741 = vmatprep.subr.mxu0 0.0
          %1742 = vmatpush2.msra.mxu0 0.0
          %1743 = vmatprep.subr.mxu0 0.0
          %1744 = vmatpush2.msra.mxu0 0.0
          %1745 = vmatprep.subr.mxu0 0.0
          %1746 = vmatpush2.msra.mxu0 0.0
          %1747 = vmatprep.subr.mxu0 0.0
          %1748 = vmatpush2.msra.mxu0 0.0
          %1749 = vmatprep.subr.mxu0 0.0
          %1750 = vmatpush2.msra.mxu0 0.0
          %1751 = vmatprep.subr.mxu0 0.0
          %1752 = vmatpush2.msra.mxu0 0.0
          %1753 = vmatprep.subr.mxu0 0.0
          %1754 = vmatpush2.msra.mxu0 0.0
          %1755 = vmatprep.mubr.f32.mxu0 0.0
          %1756 = vmatmul.mubr.f32.gmra.mxu0 %v1667
          %v1757 = vpop.f32.mrf.mxu0
          %v1758 = vadd.f32 %v1689, %v1757
          %v1759 = vpop.f32.mrf.mxu0
          %1760 = vdwg.mxu0
          %1761 = vst [vmem:[#allocation10] sm:$0xff] %v1758
        $region100: #{tpu_custom_call.1} parent=79 // pred_fallthru
          _
        // Predicated region
        $region101: #{tpu_custom_call.1} parent=79 // pred_check
          %p1762 = pneg %p368
        $region102: #{tpu_custom_call.1} parent=79 // pred_check_branch
          %1764 = sbr.rel (%p1762) target = $region104
        $region103: #{tpu_custom_call.1} parent=79 // pred_region
          %s1766 = ssub.s32 128, 128
          %1767 = vsyncadd [#allocation6], %s1766
          %s1769 = sshll.u32 [#allocation10], 4
          %s1770 = int_to_ptr.vmem [resolvable:$true] %s1769
          %1772 = dma.vmem_to_hbm [thread:$0]  %s1770, 128, %s15, [#allocation6]
        $region104: #{tpu_custom_call.1} parent=79 // pred_fallthru
          _
        // Predicated region
        $region105: #{tpu_custom_call.1} parent=79 // pred_check
          %p1773 = pneg %p368
        $region106: #{tpu_custom_call.1} parent=79 // pred_check_branch
          %1775 = sbr.rel (%p1773) target = $region108
        $region107: #{tpu_custom_call.1} parent=79 // pred_region
          %1776 = dma.done [#allocation6], 128
        $region108: #{tpu_custom_call.1} parent=79 // pred_fallthru
          _
      $region80: #{tpu_custom_call.1} parent=5 // pred_fallthru
        _
      %p1777 = scmp.le.s32.totalorder 2, %s25
      // Predicated region
      $region109: #{tpu_custom_call.1} parent=5 // pred_check
        %p1778 = pneg %p1777
      $region110: #{tpu_custom_call.1} parent=5 // pred_check_branch
        %1780 = sbr.rel (%p1778) target = $region112
      $region111: #{tpu_custom_call.1} parent=5 // pred_region
        %s1781 = ssub.s32 %s25, 2
      $region112: #{tpu_custom_call.1} parent=5 // pred_fallthru
        _
    $region6: #{tpu_custom_call.1} parent=1 // loop_footer
      %s29 = sadd.s32 1, %s25
    $region7: #{tpu_custom_call.1} parent=1 // loop_footer_branch
      %24 = sbr.rel target = $region3
    $region8: #{tpu_custom_call.1} parent=1 // loop_exit
      _
    %1782 = vsyncpa [#allocation5], 1
    %s1783 = scalar_lea.sflag [#allocation5], 1
    %1784 = vsyncpa %s1783, 1
    %1785 = vsyncpa [#allocation8], 1
    %1786 = vsyncpa [#allocation6], 1
    %s1787 = scalar_lea.sflag [#allocation6], 1
    %1788 = vsyncpa %s1787, 1

</llo_original>
